<compile_context>
chip_gen: v6e
topology: v6e:2x2x1
jax: 0.10.0
libtpu: 0.0.40
codegen_flags: <defaults>
</compile_context>

<pallas_src>
import functools

import jax
import jax.numpy as jnp
from jax.experimental import pallas as pl
from jax.experimental.pallas import tpu as pltpu

N_EMBED = 384          # fixed by the module
BLOCK_SIZE = 256       # max seq length (tril buffer size in the module)
HP = 128               # per-projection lane-padded width (>= head_size)


def _head_kernel(x_ref, wq_ref, wkv_ref, o_ref, *, scale, tq):
    # x_ref  : (1, T, C)   full sequence for this batch element (f32)
    # wq_ref : (C, HP)     bf16, zero-padded query projection
    # wkv_ref: (C, 2*HP)   bf16, zero-padded [key | value] projections
    # o_ref  : (1, tq, HP) f32, lane-dense padded output slab
    qi = pl.program_id(1)
    q_start = pl.multiple_of(qi * tq, tq)

    x_bf = x_ref[0].astype(jnp.bfloat16)                          # (T, C)
    xq_bf = x_ref[0, pl.ds(q_start, tq), :].astype(jnp.bfloat16)  # (tq, C)

    # Projections on the MXU, f32 accumulation. Scale goes on q (fewest elems).
    q = jnp.dot(xq_bf, wq_ref[...],
                preferred_element_type=jnp.float32) * scale        # (tq, HP)
    kv = jnp.dot(x_bf, wkv_ref[...],
                 preferred_element_type=jnp.float32)                # (T, 2*HP)
    k = kv[:, 0:HP]                                                 # (T, HP)
    v = kv[:, HP:2 * HP]                                            # (T, HP)

    # Attention scores: contract the last dim of both q and k (no k.T).
    # Padded columns of q/k are zero, so they contribute nothing.
    wei = jax.lax.dot_general(
        q.astype(jnp.bfloat16), k.astype(jnp.bfloat16),
        dimension_numbers=(((1,), (1,)), ((), ())),
        preferred_element_type=jnp.float32)                         # (tq, T)

    # Causal mask: global query row = q_start + local row; keep col <= row.
    # Small (tq,1)/(1,T) iotas, broadcast only inside the compare.
    row = q_start + jax.lax.broadcasted_iota(jnp.int32, (tq, 1), 0)
    col = jax.lax.broadcasted_iota(jnp.int32, (1, wei.shape[1]), 1)
    wei = jnp.where(col <= row, wei, -jnp.inf)

    # Numerically-stable softmax along the last axis (every row has >= 1
    # unmasked entry, the diagonal, so the max is finite).
    wei = wei - jnp.max(wei, axis=-1, keepdims=True)
    p = jnp.exp(wei)
    p = p * pl.reciprocal(jnp.sum(p, axis=-1, keepdims=True), approx=True)

    # Dropout is identity in eval mode.
    out = jnp.dot(p.astype(jnp.bfloat16), v.astype(jnp.bfloat16),
                  preferred_element_type=jnp.float32)               # (tq, HP)
    o_ref[0] = out.astype(o_ref.dtype)


def prepare_head_params(wk, wq, wv):
    """One-time parameter prep (do NOT call per forward).

    wk/wq/wv: (C, H) float32.  Returns (wq_p, wkv_p) bf16, each projection
    zero-padded to HP=128 output columns so q/k/v slabs are lane-aligned.
    """
    C, H = wk.shape
    assert H <= HP, f"head_size {H} > {HP} not supported by this kernel"

    def pad(w):
        return jnp.pad(w, ((0, 0), (0, HP - H)))

    wq_p = pad(wq).astype(jnp.bfloat16)                              # (C, HP)
    wkv_p = jnp.concatenate([pad(wk), pad(wv)], axis=1).astype(jnp.bfloat16)
    return wq_p, wkv_p                                               # (C, 2*HP)


def head_forward(x, wq_p, wkv_p, head_size):
    """x: (B, T, C) float32; wq_p/(wkv_p): prepared bf16 weights.

    Returns (B, T, head_size) float32.
    """
    B, T, C = x.shape
    assert C == N_EMBED and T <= BLOCK_SIZE
    scale = float(C) ** -0.5

    # Query tile: 128 rows when the sequence divides evenly, else whole T.
    tq = 128 if (T % 128 == 0) else T
    num_q = T // tq

    kernel = functools.partial(_head_kernel, scale=scale, tq=tq)

    out_padded = pl.pallas_call(
        kernel,
        out_shape=jax.ShapeDtypeStruct((B, T, HP), jnp.float32),
        grid_spec=pltpu.PrefetchScalarGridSpec(
            num_scalar_prefetch=0,
            grid=(B, num_q),
            in_specs=[
                # Full-sequence x block: constant in qi -> re-DMA'd only when
                # the batch index changes.
                pl.BlockSpec((1, T, C), lambda b, qi: (b, 0, 0)),
                # Weights: constant index_map -> fetched once.
                pl.BlockSpec((C, HP), lambda b, qi: (0, 0)),
                pl.BlockSpec((C, 2 * HP), lambda b, qi: (0, 0)),
            ],
            out_specs=pl.BlockSpec((1, tq, HP), lambda b, qi: (b, qi, 0)),
        ),
        compiler_params=pltpu.CompilerParams(
            dimension_semantics=("parallel", "parallel"),
        ),
    )(x, wq_p, wkv_p)

    # Drop the zero-padded lanes (padded v columns are zero, so this is exact).
    return out_padded[:, :, :head_size]


def _reference(x, wk, wq, wv):
    """Pure-JAX f32 reference mirroring the PyTorch forward (eval mode)."""
    B, T, C = x.shape
    k = x @ wk
    q = x @ wq
    v = x @ wv
    wei = (q @ jnp.swapaxes(k, -2, -1)) * C ** (-0.5)
    mask = jnp.tril(jnp.ones((T, T), dtype=bool))
    wei = jnp.where(mask, wei, -jnp.inf)
    wei = jax.nn.softmax(wei, axis=-1)
    return wei @ v


if __name__ == "__main__":
    key = jax.random.PRNGKey(0)
    B, T, C = 2, 256, N_EMBED          # T = block_size -> exercises 2 q-tiles
    head_size = 64

    kx, kk, kq, kv = jax.random.split(key, 4)
    x = jax.random.normal(kx, (B, T, C), dtype=jnp.float32)
    # deterministic "Linear(no-bias)" weights, stored as (C, H) = W^T
    w_scale = C ** -0.5
    wk = jax.random.normal(kk, (C, head_size), dtype=jnp.float32) * w_scale
    wq = jax.random.normal(kq, (C, head_size), dtype=jnp.float32) * w_scale
    wv = jax.random.normal(kv, (C, head_size), dtype=jnp.float32) * w_scale

    # One-time weight preparation (outside the per-call path).
    wq_p, wkv_p = prepare_head_params(wk, wq, wv)

    out = head_forward(x, wq_p, wkv_p, head_size)
    out = jax.block_until_ready(out)

    ref = _reference(x, wk, wq, wv)
    assert out.shape == (B, T, head_size)
    # bf16 MXU operands with f32 accumulation (+ approx reciprocal in the
    # softmax denom): compare against the f32 reference at a tolerance
    # consistent with bf16 rounding.
    assert jnp.allclose(out, ref, atol=5e-2, rtol=5e-2), float(
        jnp.max(jnp.abs(out - ref))
    )
    print("KERNEL_OK")
</pallas_src>

<mosaic_0001>
module attributes {stable_mosaic.version = 11 : i64} {
  func.func @_head_kernel(%arg0: i32, %arg1: i32, %arg2: memref<1x256x384xf32, #tpu.memory_space<vmem>>, %arg3: memref<384x128xbf16, #tpu.memory_space<vmem>>, %arg4: memref<384x256xbf16, #tpu.memory_space<vmem>>, %arg5: memref<1x128x128xf32, #tpu.memory_space<vmem>>) attributes {dimension_semantics = [#tpu.dimension_semantics<parallel>, #tpu.dimension_semantics<parallel>], iteration_bounds = array<i64: 2, 2>, scalar_prefetch = 0 : i64, scratch_operands = 0 : i64, tpu.core_type = #tpu.core_type<tc>, window_params = [{transform_indices = @transform_0, window_bounds = array<i64: 1, 256, 384>}, {pipeline_mode = #tpu.pipeline_mode<synchronous>, transform_indices = @transform_1, window_bounds = array<i64: 384, 128>}, {pipeline_mode = #tpu.pipeline_mode<synchronous>, transform_indices = @transform_2, window_bounds = array<i64: 384, 256>}, {transform_indices = @transform_3, window_bounds = array<i64: 1, 128, 128>}]} {
    %c128_i32 = arith.constant 128 : i32
    %0 = arith.muli %arg1, %c128_i32 : i32
    %1 = tpu.assume_multiple %0, 128 : i32
    %c0 = arith.constant 0 : index
    %c0_0 = arith.constant 0 : index
    %c0_1 = arith.constant 0 : index
    %2 = vector.load %arg2[%c0, %c0_0, %c0_1] : memref<1x256x384xf32, #tpu.memory_space<vmem>>, vector<1x256x384xf32>
    %3 = vector.shape_cast %2 : vector<1x256x384xf32> to vector<256x384xf32>
    %4 = arith.truncf %3 : vector<256x384xf32> to vector<256x384xbf16>
    %c0_2 = arith.constant 0 : index
    %5 = arith.index_cast %1 : i32 to index
    %c0_3 = arith.constant 0 : index
    %6 = vector.load %arg2[%c0_2, %5, %c0_3] : memref<1x256x384xf32, #tpu.memory_space<vmem>>, vector<1x128x384xf32>
    %7 = vector.shape_cast %6 : vector<1x128x384xf32> to vector<128x384xf32>
    %8 = arith.truncf %7 : vector<128x384xf32> to vector<128x384xbf16>
    %c0_4 = arith.constant 0 : index
    %c0_5 = arith.constant 0 : index
    %9 = vector.load %arg3[%c0_4, %c0_5] : memref<384x128xbf16, #tpu.memory_space<vmem>>, vector<384x128xbf16>
    %cst = arith.constant dense<0.000000e+00> : vector<128x128xf32>
    %10 = tpu.matmul %8, %9, %cst {dimension_numbers = #tpu.dot_dimension_numbers<[1], [0], [0], [1], [0, 0, 1, 1], [], []>} : vector<128x384xbf16>, vector<384x128xbf16>, vector<128x128xf32> -> vector<128x128xf32>
    %cst_6 = arith.constant 0.0510310382 : f32
    %11 = vector.broadcast %cst_6 : f32 to vector<128x128xf32>
    %12 = arith.mulf %10, %11 : vector<128x128xf32>
    %c0_7 = arith.constant 0 : index
    %c0_8 = arith.constant 0 : index
    %13 = vector.load %arg4[%c0_7, %c0_8] : memref<384x256xbf16, #tpu.memory_space<vmem>>, vector<384x256xbf16>
    %cst_9 = arith.constant dense<0.000000e+00> : vector<256x256xf32>
    %14 = tpu.matmul %4, %13, %cst_9 {dimension_numbers = #tpu.dot_dimension_numbers<[1], [0], [0], [1], [0, 0, 1, 1], [], []>} : vector<256x384xbf16>, vector<384x256xbf16>, vector<256x256xf32> -> vector<256x256xf32>
    %15 = vector.extract_strided_slice %14 {offsets = [0, 0], sizes = [256, 128], strides = [1, 1]} : vector<256x256xf32> to vector<256x128xf32>
    %16 = vector.extract_strided_slice %14 {offsets = [0, 128], sizes = [256, 128], strides = [1, 1]} : vector<256x256xf32> to vector<256x128xf32>
    %17 = arith.truncf %12 : vector<128x128xf32> to vector<128x128xbf16>
    %18 = arith.truncf %15 : vector<256x128xf32> to vector<256x128xbf16>
    %cst_10 = arith.constant dense<0.000000e+00> : vector<128x256xf32>
    %19 = tpu.matmul %17, %18, %cst_10 {dimension_numbers = #tpu.dot_dimension_numbers<[1], [1], [0], [0], [0, 0, 1, 0], [], []>} : vector<128x128xbf16>, vector<256x128xbf16>, vector<128x256xf32> -> vector<128x256xf32>
    %20 = tpu.iota {dimensions = array<i32: 0>} : vector<128x1xi32>
    %21 = vector.broadcast %1 : i32 to vector<128x1xi32>
    %22 = arith.addi %21, %20 : vector<128x1xi32>
    %23 = tpu.iota {dimensions = array<i32: 1>} : vector<1x256xi32>
    %24 = vector.broadcast %23 : vector<1x256xi32> to vector<128x256xi32>
    %25 = vector.broadcast %22 : vector<128x1xi32> to vector<128x256xi32>
    %26 = arith.cmpi sle, %24, %25 : vector<128x256xi32>
    %cst_11 = arith.constant 0xFF800000 : f32
    %27 = vector.broadcast %cst_11 : f32 to vector<128x256xf32>
    %28 = arith.select %26, %19, %27 : vector<128x256xi1>, vector<128x256xf32>
    %cst_12 = arith.constant dense<0xFF800000> : vector<128xf32>
    %29 = vector.multi_reduction <maximumf>, %28, %cst_12 [1] : vector<128x256xf32> to vector<128xf32>
    %30 = vector.shape_cast %29 : vector<128xf32> to vector<128x1xf32>
    %31 = vector.broadcast %30 : vector<128x1xf32> to vector<128x256xf32>
    %32 = arith.subf %28, %31 : vector<128x256xf32>
    %33 = math.exp %32 : vector<128x256xf32>
    %cst_13 = arith.constant dense<0.000000e+00> : vector<128xf32>
    %34 = vector.multi_reduction <add>, %33, %cst_13 [1] : vector<128x256xf32> to vector<128xf32>
    %35 = vector.shape_cast %34 : vector<128xf32> to vector<128x1xf32>
    %36 = tpu.reciprocal %35 {approx = true} : vector<128x1xf32> -> vector<128x1xf32>
    %37 = vector.broadcast %36 : vector<128x1xf32> to vector<128x256xf32>
    %38 = arith.mulf %33, %37 : vector<128x256xf32>
    %39 = arith.truncf %38 : vector<128x256xf32> to vector<128x256xbf16>
    %40 = arith.truncf %16 : vector<256x128xf32> to vector<256x128xbf16>
    %cst_14 = arith.constant dense<0.000000e+00> : vector<128x128xf32>
    %41 = tpu.matmul %39, %40, %cst_14 {dimension_numbers = #tpu.dot_dimension_numbers<[1], [0], [0], [1], [0, 0, 1, 1], [], []>} : vector<128x256xbf16>, vector<256x128xbf16>, vector<128x128xf32> -> vector<128x128xf32>
    %c0_15 = arith.constant 0 : index
    %c0_16 = arith.constant 0 : index
    %c0_17 = arith.constant 0 : index
    %42 = vector.load %arg5[%c0_15, %c0_16, %c0_17] : memref<1x128x128xf32, #tpu.memory_space<vmem>>, vector<1x128x128xf32>
    %43 = vector.shape_cast %42 : vector<1x128x128xf32> to vector<128x128xf32>
    %44 = vector.shape_cast %41 : vector<128x128xf32> to vector<1x128x128xf32>
    tpu.vector_store %arg5[%c0_15, %c0_16, %c0_17], %44 {strides = array<i32>} : memref<1x128x128xf32, #tpu.memory_space<vmem>>, vector<1x128x128xf32>,
    return
  }
  func.func @transform_0(%arg0: i32, %arg1: i32) -> (i32, i32, i32) {
    %c0_i32 = arith.constant 0 : i32
    %c0_i32_0 = arith.constant 0 : i32
    %c0_i32_1 = arith.constant 0 : i32
    return %arg0, %c0_i32, %c0_i32_0 : i32, i32, i32
  }
  func.func @transform_1(%arg0: i32, %arg1: i32) -> (i32, i32) {
    %c0_i32 = arith.constant 0 : i32
    %c0_i32_0 = arith.constant 0 : i32
    %c0_i32_1 = arith.constant 0 : i32
    return %c0_i32, %c0_i32_0 : i32, i32
  }
  func.func @transform_2(%arg0: i32, %arg1: i32) -> (i32, i32) {
    %c0_i32 = arith.constant 0 : i32
    %c0_i32_0 = arith.constant 0 : i32
    %c0_i32_1 = arith.constant 0 : i32
    return %c0_i32, %c0_i32_0 : i32, i32
  }
  func.func @transform_3(%arg0: i32, %arg1: i32) -> (i32, i32, i32) {
    %c0_i32 = arith.constant 0 : i32
    %c0_i32_0 = arith.constant 0 : i32
    return %arg0, %arg1, %c0_i32 : i32, i32, i32
  }
}

</mosaic_0001>

<llo_original>
// kernel: tpu_custom_call.1
$region0: #{tpu_custom_call.1}
  #allocation0 [shape = 'u32[]', space=smem, size = 0x4, offset = 0x4, fixed_abs, tag = 'smem constant byte address 0x4 - core index']
  #allocation1 [shape = 'u32[144,128]{1,0:T(1,128)}', space=vmem, size = 0x12000, scoped, tag = 'internal scratch']
  %s0 = inlined_call_operand.hbm [shape: f32[2,256,384], index: 0, kind: input, shape index: {}]
  %s1 = inlined_call_operand.hbm [shape: bf16[384,128], index: 1, kind: input, shape index: {}]
  %s2 = inlined_call_operand.hbm [shape: bf16[384,256], index: 2, kind: input, shape index: {}]
  %s3 = inlined_call_operand.hbm [shape: f32[2,256,128], index: 3, kind: output, shape index: {}]
  %s4 = sld [smem:[#allocation0]]
  $region57: #{tpu_custom_call.1} parent=0
    _
  %s6 = ssub.s32 1, %s4
  %s7 = scalar_select 0, %s6, %s4
  $region1: #{tpu_custom_call.1} parent=0
    #allocation2 [shape = 'u8[786432]{0}', space=vmem, size = 0xc0000, scoped, tag = 'input window, operand 0']
    #allocation3 [shape = 's32[2]{0}', space=sflag, size = 0x8, scoped, tag = 'scoped memory for tpu_custom_call.1']
    #allocation4 [shape = 's32[2]{0}', space=sflag, size = 0x8, scoped, tag = 'scoped memory for tpu_custom_call.1']
    #allocation5 [shape = 'u8[98304]{0}', space=vmem, size = 0x18000, scoped, tag = 'input window, operand 1, single buffered']
    #allocation6 [shape = 's32[1]{0}', space=sflag, size = 0x4, scoped, tag = 'scoped memory for tpu_custom_call.1']
    #allocation7 [shape = 'u8[196608]{0}', space=vmem, size = 0x30000, scoped, tag = 'input window, operand 2, single buffered']
    #allocation8 [shape = 'u8[131072]{0}', space=vmem, size = 0x20000, scoped, tag = 'output window, operand 0']
    %8 = vsyncpa [#allocation3], 0
    %s9 = scalar_lea.sflag [#allocation3], 1
    %10 = vsyncpa %s9, 0
    %11 = vsyncpa [#allocation6], 0
    %12 = vsyncpa [#allocation4], 0
    %s13 = scalar_lea.sflag [#allocation4], 1
    %14 = vsyncpa %s13, 0
    loop: start=0, step=1, limit=6
    $region2: #{tpu_custom_call.1} parent=1 // loop_pre_header
      _
    $region3: #{tpu_custom_call.1} parent=1 // loop_header
      %s16 = sphi 0, %s20
      %p17 = scmp.ge.s32.totalorder %s16, 6
      %s23 = sphi 0, %s35
      %s24 = sphi 0, %s31
      %s25 = sphi 0, %s23
      %s26 = sphi 0, %s24
      %s27 = sphi 0, %s25
      %s28 = sphi 0, %s26
      %s38 = sphi 0, %s40
      %s41 = sphi 0, %s38
      %s42 = sphi 0, %s41
      %s58 = sphi 0, %s42
      %s62 = sphi 0, %s62
      %s64 = sphi 0, %s62
      %s65 = sphi 0, %s64
      %s79 = sphi 0, %s65
      %s83 = sphi 0, %s83
      %s85 = sphi 0, %s83
      %s86 = sphi 0, %s85
      %s100 = sphi 0, %s86
      %s108 = sphi 0, %s110
      %s111 = sphi 0, %s108
      %s112 = sphi 0, %s111
      %s128 = sphi 0, %s112
    $region4: #{tpu_custom_call.1} parent=1 // loop_header_branch
      %19 = sbr.rel (%p17) target = $region8
    $region5: #{tpu_custom_call.1} parent=1 // loop_body
      %s21 = ssub.s32 %s16, 1
      %s22 = ssub.s32 %s16, 2
      %s29 = sadd.s32 1, %s24
      %p30 = scmp.ge.s32.totalorder %s29, 2
      %s31 = scalar_select %p30, 0, %s29
      %s32 = sadd.s32 1, %s23
      %s33 = scalar_select %p30, %s32, %s23
      %p34 = scmp.ge.s32.totalorder %s33, 2
      %s35 = scalar_select %p34, 0, %s33
      %s36 = ssub.s32 %s23, %s35
      %p37 = scmp.eq.s32.totalorder %s36, 0
      %s39 = sadd.s32 %s38, 1
      %s40 = scalar_select %p37, %s38, %s39
      %p43 = pneg %p37
      %p44 = scmp.eq.s32.totalorder %s16, 3
      %p45 = por %p43, %p44
      %p46 = scmp.ne.s32.totalorder %s38, %s41
      %p47 = scmp.eq.s32.totalorder %s16, 0
      %p48 = por %p46, %p47
      %p49 = scmp.ne.s32.totalorder %s38, %s41
      %p50 = scmp.eq.s32.totalorder %s21, 3
      %p51 = por %p49, %p50
      %p52 = scmp.ne.s32.totalorder %s41, %s42
      %p53 = scmp.eq.s32.totalorder %s21, 0
      %p54 = por %p52, %p53
      %p55 = scmp.ne.s32.totalorder %s41, %s42
      %p56 = scmp.eq.s32.totalorder %s22, 3
      %p57 = por %p55, %p56
      %p59 = scmp.ne.s32.totalorder %s42, %s58
      %p60 = scmp.eq.s32.totalorder %s22, 0
      %p61 = por %p59, %p60
      %s63 = sadd.s32 %s62, 1
      %p66 = scmp.eq.s32.totalorder %s16, 3
      %p67 = scmp.ne.s32.totalorder %s62, %s64
      %p68 = scmp.eq.s32.totalorder %s16, 0
      %p69 = por %p67, %p68
      %p70 = scmp.ne.s32.totalorder %s62, %s64
      %p71 = scmp.eq.s32.totalorder %s21, 3
      %p72 = por %p70, %p71
      %p73 = scmp.ne.s32.totalorder %s64, %s65
      %p74 = scmp.eq.s32.totalorder %s21, 0
      %p75 = por %p73, %p74
      %p76 = scmp.ne.s32.totalorder %s64, %s65
      %p77 = scmp.eq.s32.totalorder %s22, 3
      %p78 = por %p76, %p77
      %p80 = scmp.ne.s32.totalorder %s65, %s79
      %p81 = scmp.eq.s32.totalorder %s22, 0
      %p82 = por %p80, %p81
      %s84 = sadd.s32 %s83, 1
      %p87 = scmp.eq.s32.totalorder %s16, 3
      %p88 = scmp.ne.s32.totalorder %s83, %s85
      %p89 = scmp.eq.s32.totalorder %s16, 0
      %p90 = por %p88, %p89
      %p91 = scmp.ne.s32.totalorder %s83, %s85
      %p92 = scmp.eq.s32.totalorder %s21, 3
      %p93 = por %p91, %p92
      %p94 = scmp.ne.s32.totalorder %s85, %s86
      %p95 = scmp.eq.s32.totalorder %s21, 0
      %p96 = por %p94, %p95
      %p97 = scmp.ne.s32.totalorder %s85, %s86
      %p98 = scmp.eq.s32.totalorder %s22, 3
      %p99 = por %p97, %p98
      %p101 = scmp.ne.s32.totalorder %s86, %s100
      %p102 = scmp.eq.s32.totalorder %s22, 0
      %p103 = por %p101, %p102
      %s104 = ssub.s32 %s23, %s35
      %s105 = ssub.s32 %s24, %s31
      %s106 = sor.u32 %s104, %s105
      %p107 = scmp.eq.s32.totalorder %s106, 0
      %s109 = sadd.s32 %s108, 1
      %s110 = scalar_select %p107, %s108, %s109
      %p113 = pneg %p107
      %p114 = scmp.eq.s32.totalorder %s16, 3
      %p115 = por %p113, %p114
      %p116 = scmp.ne.s32.totalorder %s108, %s111
      %p117 = scmp.eq.s32.totalorder %s16, 0
      %p118 = por %p116, %p117
      %p119 = scmp.ne.s32.totalorder %s108, %s111
      %p120 = scmp.eq.s32.totalorder %s21, 3
      %p121 = por %p119, %p120
      %p122 = scmp.ne.s32.totalorder %s111, %s112
      %p123 = scmp.eq.s32.totalorder %s21, 0
      %p124 = por %p122, %p123
      %p125 = scmp.ne.s32.totalorder %s111, %s112
      %p126 = scmp.eq.s32.totalorder %s22, 3
      %p127 = por %p125, %p126
      %p129 = scmp.ne.s32.totalorder %s112, %s128
      %p130 = scmp.eq.s32.totalorder %s22, 0
      %p131 = por %p129, %p130
      %p132 = scmp.le.s32.totalorder 1, %s16
      %p133 = scmp.lt.s32.totalorder %s16, 5
      %p134 = pnand %p132, %p133
      %p135 = pneg %p134
      // Predicated region
      $region9: #{tpu_custom_call.1} parent=5 // pred_check
        _
      $region10: #{tpu_custom_call.1} parent=5 // pred_check_branch
        %137 = sbr.rel (%p134) target = $region12
      $region11: #{tpu_custom_call.1} parent=5 // pred_region
        %s138 = ssub.s32 %s16, 1
        // Predicated region
        $region13: #{tpu_custom_call.1} parent=11 // pred_check
          %p139 = pneg %p75
        $region14: #{tpu_custom_call.1} parent=11 // pred_check_branch
          %141 = sbr.rel (%p139) target = $region16
        $region15: #{tpu_custom_call.1} parent=11 // pred_region
          %s143 = ssub.s32 3072, 3072
          %144 = vsyncadd [#allocation6], %s143
          %s145 = sshll.u32 [#allocation5], 4
          %s146 = int_to_ptr.vmem [resolvable:$true] %s145
          %151 = dma.hbm_to_vmem [thread:$0]  %s1, 3072, %s146, [#allocation6], 64, 64, 4
        $region16: #{tpu_custom_call.1} parent=11 // pred_fallthru
          _
        // Predicated region
        $region17: #{tpu_custom_call.1} parent=11 // pred_check
          %p152 = pneg %p96
        $region18: #{tpu_custom_call.1} parent=11 // pred_check_branch
          %154 = sbr.rel (%p152) target = $region20
        $region19: #{tpu_custom_call.1} parent=11 // pred_region
          %s156 = ssub.s32 6144, 6144
          %157 = vsyncadd [#allocation6], %s156
          %s158 = sshll.u32 [#allocation7], 4
          %s159 = int_to_ptr.vmem [resolvable:$true] %s158
          %164 = dma.hbm_to_vmem [thread:$0]  %s2, 6144, %s159, [#allocation6], 128, 128, 8
        $region20: #{tpu_custom_call.1} parent=11 // pred_fallthru
          _
      $region12: #{tpu_custom_call.1} parent=5 // pred_fallthru
        _
      %p165 = scmp.lt.s32.totalorder %s16, 4
      // Predicated region
      $region21: #{tpu_custom_call.1} parent=5 // pred_check
        %p166 = pneg %p165
      $region22: #{tpu_custom_call.1} parent=5 // pred_check_branch
        %168 = sbr.rel (%p166) target = $region24
      $region23: #{tpu_custom_call.1} parent=5 // pred_region
        // Predicated region
        $region25: #{tpu_custom_call.1} parent=23 // pred_check
          %p169 = pneg %p48
        $region26: #{tpu_custom_call.1} parent=23 // pred_check_branch
          %171 = sbr.rel (%p169) target = $region28
        $region27: #{tpu_custom_call.1} parent=23 // pred_region
          %s172 = sand.u32 %s38, 1
          %s173 = scalar_lea.sflag [#allocation3], %s172
          %s174 = sand.u32 %s38, 1
          %s175 = smul.addr %s174, 768
          %s176 = scalar_lea.vmem [#allocation2], %s175
          %s178 = ssub.s32 12288, 12288
          %179 = vsyncadd %s173, %s178
          %s180 = smul.addr %s23, 96
          %s181 = smul.addr %s180, 128
          %s182 = scalar_lea.hbm %s0, %s181
          %s183 = sshll.u32 %s176, 4
          %s184 = int_to_ptr.vmem [resolvable:$true] %s183
          %189 = dma.hbm_to_vmem [thread:$0]  %s182, 12288, %s184, %s173, 384, 384, 24
        $region28: #{tpu_custom_call.1} parent=23 // pred_fallthru
          _
      $region24: #{tpu_custom_call.1} parent=5 // pred_fallthru
        _
      %p190 = scmp.le.s32.totalorder 1, %s16
      %p191 = scmp.lt.s32.totalorder %s16, 5
      %p192 = pnand %p190, %p191
      %p193 = pneg %p192
      // Predicated region
      $region29: #{tpu_custom_call.1} parent=5 // pred_check
        _
      $region30: #{tpu_custom_call.1} parent=5 // pred_check_branch
        %195 = sbr.rel (%p192) target = $region32
      $region31: #{tpu_custom_call.1} parent=5 // pred_region
        %s196 = ssub.s32 %s16, 1
        %s197 = sand.u32 %s41, 1
        %s198 = scalar_lea.sflag [#allocation3], %s197
        %s199 = sand.u32 %s41, 1
        %s200 = smul.addr %s199, 768
        %s201 = scalar_lea.vmem [#allocation2], %s200
        // Predicated region
        $region33: #{tpu_custom_call.1} parent=31 // pred_check
          %p202 = pneg %p54
        $region34: #{tpu_custom_call.1} parent=31 // pred_check_branch
          %204 = sbr.rel (%p202) target = $region36
        $region35: #{tpu_custom_call.1} parent=31 // pred_region
          %205 = dma.done %s198, 12288
        $region36: #{tpu_custom_call.1} parent=31 // pred_fallthru
          _
        // Predicated region
        $region37: #{tpu_custom_call.1} parent=31 // pred_check
          %p206 = pneg %p75
        $region38: #{tpu_custom_call.1} parent=31 // pred_check_branch
          %208 = sbr.rel (%p206) target = $region40
        $region39: #{tpu_custom_call.1} parent=31 // pred_region
          %209 = dma.done [#allocation6], 3072
        $region40: #{tpu_custom_call.1} parent=31 // pred_fallthru
          _
        // Predicated region
        $region41: #{tpu_custom_call.1} parent=31 // pred_check
          %p210 = pneg %p96
        $region42: #{tpu_custom_call.1} parent=31 // pred_check_branch
          %212 = sbr.rel (%p210) target = $region44
        $region43: #{tpu_custom_call.1} parent=31 // pred_region
          %213 = dma.done [#allocation6], 6144
        $region44: #{tpu_custom_call.1} parent=31 // pred_fallthru
          _
        %s214 = sand.u32 %s41, 1
        %s215 = scalar_lea.sflag [#allocation3], %s214
        %s216 = sand.u32 %s41, 1
        %s217 = smul.addr %s216, 768
        %s218 = scalar_lea.vmem [#allocation2], %s217
        %p219 = pneg %p54
        %p220 = pneg %p51
        %p221 = pneg %p75
        %p222 = pneg %p72
        %p223 = pneg %p96
        %p224 = pneg %p93
        %p225 = pneg %p124
        %p226 = pneg %p121
        %s227 = sand.u32 %s111, 1
        %s228 = scalar_lea.sflag [#allocation4], %s227
        %s229 = sand.u32 %s111, 1
        %s230 = smul.addr %s229, 128
        %s231 = scalar_lea.vmem [#allocation8], %s230
        %s232 = smul.u32 16, %s26
        %s234 = smul.u32 %s26, 128
        %v235 = vld [vmem:[%s201] sm:$0xff]
        %v236 = vld [vmem:[%s201 + $0x8] sm:$0xff]
        %v237 = vld [vmem:[%s201 + $0x10] sm:$0xff]
        %v238 = vld [vmem:[%s201 + $0x18] sm:$0xff]
        %v239 = vld [vmem:[%s201 + $0x20] sm:$0xff]
        %v240 = vld [vmem:[%s201 + $0x28] sm:$0xff]
        %v241 = vld [vmem:[%s201 + $0x30] sm:$0xff]
        %v242 = vld [vmem:[%s201 + $0x38] sm:$0xff]
        %v243 = vld [vmem:[%s201 + $0x40] sm:$0xff]
        %v244 = vld [vmem:[%s201 + $0x48] sm:$0xff]
        %v245 = vld [vmem:[%s201 + $0x50] sm:$0xff]
        %v246 = vld [vmem:[%s201 + $0x58] sm:$0xff]
        %v247 = vld [vmem:[%s201 + $0x60] sm:$0xff]
        %v248 = vld [vmem:[%s201 + $0x68] sm:$0xff]
        %v249 = vld [vmem:[%s201 + $0x70] sm:$0xff]
        %v250 = vld [vmem:[%s201 + $0x78] sm:$0xff]
        %v251 = vld [vmem:[%s201 + $0x80] sm:$0xff]
        %v252 = vld [vmem:[%s201 + $0x88] sm:$0xff]
        %v253 = vld [vmem:[%s201 + $0x90] sm:$0xff]
        %v254 = vld [vmem:[%s201 + $0x98] sm:$0xff]
        %v255 = vld [vmem:[%s201 + $0xa0] sm:$0xff]
        %v256 = vld [vmem:[%s201 + $0xa8] sm:$0xff]
        %v257 = vld [vmem:[%s201 + $0xb0] sm:$0xff]
        %v258 = vld [vmem:[%s201 + $0xb8] sm:$0xff]
        %v259 = vld [vmem:[%s201 + $0xc0] sm:$0xff]
        %v260 = vld [vmem:[%s201 + $0xc8] sm:$0xff]
        %v261 = vld [vmem:[%s201 + $0xd0] sm:$0xff]
        %v262 = vld [vmem:[%s201 + $0xd8] sm:$0xff]
        %v263 = vld [vmem:[%s201 + $0xe0] sm:$0xff]
        %v264 = vld [vmem:[%s201 + $0xe8] sm:$0xff]
        %v265 = vld [vmem:[%s201 + $0xf0] sm:$0xff]
        %v266 = vld [vmem:[%s201 + $0xf8] sm:$0xff]
        %v267 = vld [vmem:[%s201 + $0x100] sm:$0xff]
        %v268 = vld [vmem:[%s201 + $0x108] sm:$0xff]
        %v269 = vld [vmem:[%s201 + $0x110] sm:$0xff]
        %v270 = vld [vmem:[%s201 + $0x118] sm:$0xff]
        %v271 = vld [vmem:[%s201 + $0x120] sm:$0xff]
        %v272 = vld [vmem:[%s201 + $0x128] sm:$0xff]
        %v273 = vld [vmem:[%s201 + $0x130] sm:$0xff]
        %v274 = vld [vmem:[%s201 + $0x138] sm:$0xff]
        %v275 = vld [vmem:[%s201 + $0x140] sm:$0xff]
        %v276 = vld [vmem:[%s201 + $0x148] sm:$0xff]
        %v277 = vld [vmem:[%s201 + $0x150] sm:$0xff]
        %v278 = vld [vmem:[%s201 + $0x158] sm:$0xff]
        %v279 = vld [vmem:[%s201 + $0x160] sm:$0xff]
        %v280 = vld [vmem:[%s201 + $0x168] sm:$0xff]
        %v281 = vld [vmem:[%s201 + $0x170] sm:$0xff]
        %v282 = vld [vmem:[%s201 + $0x178] sm:$0xff]
        %v283 = vld [vmem:[%s201 + $0x180] sm:$0xff]
        %v284 = vld [vmem:[%s201 + $0x188] sm:$0xff]
        %v285 = vld [vmem:[%s201 + $0x190] sm:$0xff]
        %v286 = vld [vmem:[%s201 + $0x198] sm:$0xff]
        %v287 = vld [vmem:[%s201 + $0x1a0] sm:$0xff]
        %v288 = vld [vmem:[%s201 + $0x1a8] sm:$0xff]
        %v289 = vld [vmem:[%s201 + $0x1b0] sm:$0xff]
        %v290 = vld [vmem:[%s201 + $0x1b8] sm:$0xff]
        %v291 = vld [vmem:[%s201 + $0x1c0] sm:$0xff]
        %v292 = vld [vmem:[%s201 + $0x1c8] sm:$0xff]
        %v293 = vld [vmem:[%s201 + $0x1d0] sm:$0xff]
        %v294 = vld [vmem:[%s201 + $0x1d8] sm:$0xff]
        %v295 = vld [vmem:[%s201 + $0x1e0] sm:$0xff]
        %v296 = vld [vmem:[%s201 + $0x1e8] sm:$0xff]
        %v297 = vld [vmem:[%s201 + $0x1f0] sm:$0xff]
        %v298 = vld [vmem:[%s201 + $0x1f8] sm:$0xff]
        %v299 = vld [vmem:[%s201 + $0x200] sm:$0xff]
        %v300 = vld [vmem:[%s201 + $0x208] sm:$0xff]
        %v301 = vld [vmem:[%s201 + $0x210] sm:$0xff]
        %v302 = vld [vmem:[%s201 + $0x218] sm:$0xff]
        %v303 = vld [vmem:[%s201 + $0x220] sm:$0xff]
        %v304 = vld [vmem:[%s201 + $0x228] sm:$0xff]
        %v305 = vld [vmem:[%s201 + $0x230] sm:$0xff]
        %v306 = vld [vmem:[%s201 + $0x238] sm:$0xff]
        %v307 = vld [vmem:[%s201 + $0x240] sm:$0xff]
        %v308 = vld [vmem:[%s201 + $0x248] sm:$0xff]
        %v309 = vld [vmem:[%s201 + $0x250] sm:$0xff]
        %v310 = vld [vmem:[%s201 + $0x258] sm:$0xff]
        %v311 = vld [vmem:[%s201 + $0x260] sm:$0xff]
        %v312 = vld [vmem:[%s201 + $0x268] sm:$0xff]
        %v313 = vld [vmem:[%s201 + $0x270] sm:$0xff]
        %v314 = vld [vmem:[%s201 + $0x278] sm:$0xff]
        %v315 = vld [vmem:[%s201 + $0x280] sm:$0xff]
        %v316 = vld [vmem:[%s201 + $0x288] sm:$0xff]
        %v317 = vld [vmem:[%s201 + $0x290] sm:$0xff]
        %v318 = vld [vmem:[%s201 + $0x298] sm:$0xff]
        %v319 = vld [vmem:[%s201 + $0x2a0] sm:$0xff]
        %v320 = vld [vmem:[%s201 + $0x2a8] sm:$0xff]
        %v321 = vld [vmem:[%s201 + $0x2b0] sm:$0xff]
        %v322 = vld [vmem:[%s201 + $0x2b8] sm:$0xff]
        %v323 = vld [vmem:[%s201 + $0x2c0] sm:$0xff]
        %v324 = vld [vmem:[%s201 + $0x2c8] sm:$0xff]
        %v325 = vld [vmem:[%s201 + $0x2d0] sm:$0xff]
        %v326 = vld [vmem:[%s201 + $0x2d8] sm:$0xff]
        %v327 = vld [vmem:[%s201 + $0x2e0] sm:$0xff]
        %v328 = vld [vmem:[%s201 + $0x2e8] sm:$0xff]
        %v329 = vld [vmem:[%s201 + $0x2f0] sm:$0xff]
        %v330 = vld [vmem:[%s201 + $0x2f8] sm:$0xff]
        %v331 = vpack.c.bf16 %v238, %v235
        %v332 = vpack.c.bf16 %v239, %v236
        %v333 = vpack.c.bf16 %v240, %v237
        %v334 = vpack.c.bf16 %v244, %v241
        %v335 = vpack.c.bf16 %v245, %v242
        %v336 = vpack.c.bf16 %v246, %v243
        %v337 = vpack.c.bf16 %v250, %v247
        %v338 = vpack.c.bf16 %v251, %v248
        %v339 = vpack.c.bf16 %v252, %v249
        %v340 = vpack.c.bf16 %v256, %v253
        %v341 = vpack.c.bf16 %v257, %v254
        %v342 = vpack.c.bf16 %v258, %v255
        %v343 = vpack.c.bf16 %v262, %v259
        %v344 = vpack.c.bf16 %v263, %v260
        %v345 = vpack.c.bf16 %v264, %v261
        %v346 = vpack.c.bf16 %v268, %v265
        %v347 = vpack.c.bf16 %v269, %v266
        %v348 = vpack.c.bf16 %v270, %v267
        %v349 = vpack.c.bf16 %v274, %v271
        %v350 = vpack.c.bf16 %v275, %v272
        %v351 = vpack.c.bf16 %v276, %v273
        %v352 = vpack.c.bf16 %v280, %v277
        %v353 = vpack.c.bf16 %v281, %v278
        %v354 = vpack.c.bf16 %v282, %v279
        %v355 = vpack.c.bf16 %v286, %v283
        %v356 = vpack.c.bf16 %v287, %v284
        %v357 = vpack.c.bf16 %v288, %v285
        %v358 = vpack.c.bf16 %v292, %v289
        %v359 = vpack.c.bf16 %v293, %v290
        %v360 = vpack.c.bf16 %v294, %v291
        %v361 = vpack.c.bf16 %v298, %v295
        %v362 = vpack.c.bf16 %v299, %v296
        %v363 = vpack.c.bf16 %v300, %v297
        %v364 = vpack.c.bf16 %v304, %v301
        %v365 = vpack.c.bf16 %v305, %v302
        %v366 = vpack.c.bf16 %v306, %v303
        %v367 = vpack.c.bf16 %v310, %v307
        %v368 = vpack.c.bf16 %v311, %v308
        %v369 = vpack.c.bf16 %v312, %v309
        %v370 = vpack.c.bf16 %v316, %v313
        %v371 = vpack.c.bf16 %v317, %v314
        %v372 = vpack.c.bf16 %v318, %v315
        %v373 = vpack.c.bf16 %v322, %v319
        %v374 = vpack.c.bf16 %v323, %v320
        %v375 = vpack.c.bf16 %v324, %v321
        %v376 = vpack.c.bf16 %v328, %v325
        %v377 = vpack.c.bf16 %v329, %v326
        %v378 = vpack.c.bf16 %v330, %v327
        %s379 = sshra.s32 %s234, 3
        %s380 = sand.u32 %s234, 7
        %s381 = smul.u32 %s379, 3
        %s382 = smul.addr %s381, 8
        %s383 = scalar_lea.vmem %s201, %s382 [#allocation2]
        %v384 = vld [vmem:[%s383] sm:$0xff]
        %v385 = vld [vmem:[%s383 + $0x8] sm:$0xff]
        %v386 = vld [vmem:[%s383 + $0x10] sm:$0xff]
        %v387 = vld [vmem:[%s383 + $0x18] sm:$0xff]
        %v388 = vld [vmem:[%s383 + $0x20] sm:$0xff]
        %v389 = vld [vmem:[%s383 + $0x28] sm:$0xff]
        %v390 = vld [vmem:[%s383 + $0x30] sm:$0xff]
        %v391 = vld [vmem:[%s383 + $0x38] sm:$0xff]
        %v392 = vld [vmem:[%s383 + $0x40] sm:$0xff]
        %v393 = vld [vmem:[%s383 + $0x48] sm:$0xff]
        %v394 = vld [vmem:[%s383 + $0x50] sm:$0xff]
        %v395 = vld [vmem:[%s383 + $0x58] sm:$0xff]
        %v396 = vld [vmem:[%s383 + $0x60] sm:$0xff]
        %v397 = vld [vmem:[%s383 + $0x68] sm:$0xff]
        %v398 = vld [vmem:[%s383 + $0x70] sm:$0xff]
        %v399 = vld [vmem:[%s383 + $0x78] sm:$0xff]
        %v400 = vld [vmem:[%s383 + $0x80] sm:$0xff]
        %v401 = vld [vmem:[%s383 + $0x88] sm:$0xff]
        %v402 = vld [vmem:[%s383 + $0x90] sm:$0xff]
        %v403 = vld [vmem:[%s383 + $0x98] sm:$0xff]
        %v404 = vld [vmem:[%s383 + $0xa0] sm:$0xff]
        %v405 = vld [vmem:[%s383 + $0xa8] sm:$0xff]
        %v406 = vld [vmem:[%s383 + $0xb0] sm:$0xff]
        %v407 = vld [vmem:[%s383 + $0xb8] sm:$0xff]
        %v408 = vld [vmem:[%s383 + $0xc0] sm:$0xff]
        %v409 = vld [vmem:[%s383 + $0xc8] sm:$0xff]
        %v410 = vld [vmem:[%s383 + $0xd0] sm:$0xff]
        %v411 = vld [vmem:[%s383 + $0xd8] sm:$0xff]
        %v412 = vld [vmem:[%s383 + $0xe0] sm:$0xff]
        %v413 = vld [vmem:[%s383 + $0xe8] sm:$0xff]
        %v414 = vld [vmem:[%s383 + $0xf0] sm:$0xff]
        %v415 = vld [vmem:[%s383 + $0xf8] sm:$0xff]
        %v416 = vld [vmem:[%s383 + $0x100] sm:$0xff]
        %v417 = vld [vmem:[%s383 + $0x108] sm:$0xff]
        %v418 = vld [vmem:[%s383 + $0x110] sm:$0xff]
        %v419 = vld [vmem:[%s383 + $0x118] sm:$0xff]
        %v420 = vld [vmem:[%s383 + $0x120] sm:$0xff]
        %v421 = vld [vmem:[%s383 + $0x128] sm:$0xff]
        %v422 = vld [vmem:[%s383 + $0x130] sm:$0xff]
        %v423 = vld [vmem:[%s383 + $0x138] sm:$0xff]
        %v424 = vld [vmem:[%s383 + $0x140] sm:$0xff]
        %v425 = vld [vmem:[%s383 + $0x148] sm:$0xff]
        %v426 = vld [vmem:[%s383 + $0x150] sm:$0xff]
        %v427 = vld [vmem:[%s383 + $0x158] sm:$0xff]
        %v428 = vld [vmem:[%s383 + $0x160] sm:$0xff]
        %v429 = vld [vmem:[%s383 + $0x168] sm:$0xff]
        %v430 = vld [vmem:[%s383 + $0x170] sm:$0xff]
        %v431 = vld [vmem:[%s383 + $0x178] sm:$0xff]
        %v432 = vpack.c.bf16 %v387, %v384
        %v433 = vpack.c.bf16 %v388, %v385
        %v434 = vpack.c.bf16 %v389, %v386
        %v435 = vpack.c.bf16 %v393, %v390
        %v436 = vpack.c.bf16 %v394, %v391
        %v437 = vpack.c.bf16 %v395, %v392
        %v438 = vpack.c.bf16 %v399, %v396
        %v439 = vpack.c.bf16 %v400, %v397
        %v440 = vpack.c.bf16 %v401, %v398
        %v441 = vpack.c.bf16 %v405, %v402
        %v442 = vpack.c.bf16 %v406, %v403
        %v443 = vpack.c.bf16 %v407, %v404
        %v444 = vpack.c.bf16 %v411, %v408
        %v445 = vpack.c.bf16 %v412, %v409
        %v446 = vpack.c.bf16 %v413, %v410
        %v447 = vpack.c.bf16 %v417, %v414
        %v448 = vpack.c.bf16 %v418, %v415
        %v449 = vpack.c.bf16 %v419, %v416
        %v450 = vpack.c.bf16 %v423, %v420
        %v451 = vpack.c.bf16 %v424, %v421
        %v452 = vpack.c.bf16 %v425, %v422
        %v453 = vpack.c.bf16 %v429, %v426
        %v454 = vpack.c.bf16 %v430, %v427
        %v455 = vpack.c.bf16 %v431, %v428
        %v456 = vld [vmem:[#allocation5] sm:$0xf]
        %v457 = vld [vmem:[#allocation5 + $0x4] sm:$0xf]
        %v458 = vld [vmem:[#allocation5 + $0x8] sm:$0xf]
        %v459 = vld [vmem:[#allocation5 + $0xc] sm:$0xf]
        %v460 = vld [vmem:[#allocation5 + $0x10] sm:$0xf]
        %v461 = vld [vmem:[#allocation5 + $0x14] sm:$0xf]
        %v462 = vld [vmem:[#allocation5 + $0x18] sm:$0xf]
        %v463 = vld [vmem:[#allocation5 + $0x1c] sm:$0xf]
        %v464 = vld [vmem:[#allocation5 + $0x20] sm:$0xf]
        %v465 = vld [vmem:[#allocation5 + $0x24] sm:$0xf]
        %v466 = vld [vmem:[#allocation5 + $0x28] sm:$0xf]
        %v467 = vld [vmem:[#allocation5 + $0x2c] sm:$0xf]
        %v468 = vld [vmem:[#allocation5 + $0x30] sm:$0xf]
        %v469 = vld [vmem:[#allocation5 + $0x34] sm:$0xf]
        %v470 = vld [vmem:[#allocation5 + $0x38] sm:$0xf]
        %v471 = vld [vmem:[#allocation5 + $0x3c] sm:$0xf]
        %v472 = vld [vmem:[#allocation5 + $0x40] sm:$0xf]
        %v473 = vld [vmem:[#allocation5 + $0x44] sm:$0xf]
        %v474 = vld [vmem:[#allocation5 + $0x48] sm:$0xf]
        %v475 = vld [vmem:[#allocation5 + $0x4c] sm:$0xf]
        %v476 = vld [vmem:[#allocation5 + $0x50] sm:$0xf]
        %v477 = vld [vmem:[#allocation5 + $0x54] sm:$0xf]
        %v478 = vld [vmem:[#allocation5 + $0x58] sm:$0xf]
        %v479 = vld [vmem:[#allocation5 + $0x5c] sm:$0xf]
        %v480 = vld [vmem:[#allocation5 + $0x60] sm:$0xf]
        %v481 = vld [vmem:[#allocation5 + $0x64] sm:$0xf]
        %v482 = vld [vmem:[#allocation5 + $0x68] sm:$0xf]
        %v483 = vld [vmem:[#allocation5 + $0x6c] sm:$0xf]
        %v484 = vld [vmem:[#allocation5 + $0x70] sm:$0xf]
        %v485 = vld [vmem:[#allocation5 + $0x74] sm:$0xf]
        %v486 = vld [vmem:[#allocation5 + $0x78] sm:$0xf]
        %v487 = vld [vmem:[#allocation5 + $0x7c] sm:$0xf]
        %v488 = vld [vmem:[#allocation5 + $0x80] sm:$0xf]
        %v489 = vld [vmem:[#allocation5 + $0x84] sm:$0xf]
        %v490 = vld [vmem:[#allocation5 + $0x88] sm:$0xf]
        %v491 = vld [vmem:[#allocation5 + $0x8c] sm:$0xf]
        %v492 = vld [vmem:[#allocation5 + $0x90] sm:$0xf]
        %v493 = vld [vmem:[#allocation5 + $0x94] sm:$0xf]
        %v494 = vld [vmem:[#allocation5 + $0x98] sm:$0xf]
        %v495 = vld [vmem:[#allocation5 + $0x9c] sm:$0xf]
        %v496 = vld [vmem:[#allocation5 + $0xa0] sm:$0xf]
        %v497 = vld [vmem:[#allocation5 + $0xa4] sm:$0xf]
        %v498 = vld [vmem:[#allocation5 + $0xa8] sm:$0xf]
        %v499 = vld [vmem:[#allocation5 + $0xac] sm:$0xf]
        %v500 = vld [vmem:[#allocation5 + $0xb0] sm:$0xf]
        %v501 = vld [vmem:[#allocation5 + $0xb4] sm:$0xf]
        %v502 = vld [vmem:[#allocation5 + $0xb8] sm:$0xf]
        %v503 = vld [vmem:[#allocation5 + $0xbc] sm:$0xf]
        %v552 = vunpack.c.l.b16 %v456
        %v553 = vunpack.c.l.b16 %v457
        %v554 = vunpack.c.l.b16 %v458
        %v555 = vunpack.c.l.b16 %v459
        %v556 = vunpack.c.l.b16 %v460
        %v557 = vunpack.c.l.b16 %v461
        %v558 = vunpack.c.l.b16 %v462
        %v559 = vunpack.c.l.b16 %v463
        %v560 = vunpack.c.l.b16 %v464
        %v561 = vunpack.c.l.b16 %v465
        %v562 = vunpack.c.l.b16 %v466
        %v563 = vunpack.c.l.b16 %v467
        %v564 = vunpack.c.l.b16 %v468
        %v565 = vunpack.c.l.b16 %v469
        %v566 = vunpack.c.l.b16 %v470
        %v567 = vunpack.c.l.b16 %v471
        %v568 = vunpack.c.l.b16 %v472
        %v569 = vunpack.c.l.b16 %v473
        %v570 = vunpack.c.l.b16 %v474
        %v571 = vunpack.c.l.b16 %v475
        %v572 = vunpack.c.l.b16 %v476
        %v573 = vunpack.c.l.b16 %v477
        %v574 = vunpack.c.l.b16 %v478
        %v575 = vunpack.c.l.b16 %v479
        %v576 = vunpack.c.l.b16 %v480
        %v577 = vunpack.c.l.b16 %v481
        %v578 = vunpack.c.l.b16 %v482
        %v579 = vunpack.c.l.b16 %v483
        %v580 = vunpack.c.l.b16 %v484
        %v581 = vunpack.c.l.b16 %v485
        %v582 = vunpack.c.l.b16 %v486
        %v583 = vunpack.c.l.b16 %v487
        %v584 = vunpack.c.l.b16 %v488
        %v585 = vunpack.c.l.b16 %v489
        %v586 = vunpack.c.l.b16 %v490
        %v587 = vunpack.c.l.b16 %v491
        %v588 = vunpack.c.l.b16 %v492
        %v589 = vunpack.c.l.b16 %v493
        %v590 = vunpack.c.l.b16 %v494
        %v591 = vunpack.c.l.b16 %v495
        %v592 = vunpack.c.l.b16 %v496
        %v593 = vunpack.c.l.b16 %v497
        %v594 = vunpack.c.l.b16 %v498
        %v595 = vunpack.c.l.b16 %v499
        %v596 = vunpack.c.l.b16 %v500
        %v597 = vunpack.c.l.b16 %v501
        %v598 = vunpack.c.l.b16 %v502
        %v599 = vunpack.c.l.b16 %v503
        %v600 = vpack.c.b16 %v553, %v552
        %v601 = vpack.c.b16 %v555, %v554
        %v602 = vpack.c.b16 %v557, %v556
        %v603 = vpack.c.b16 %v559, %v558
        %v604 = vpack.c.b16 %v561, %v560
        %v605 = vpack.c.b16 %v563, %v562
        %v606 = vpack.c.b16 %v565, %v564
        %v607 = vpack.c.b16 %v567, %v566
        %v608 = vpack.c.b16 %v569, %v568
        %v609 = vpack.c.b16 %v571, %v570
        %v610 = vpack.c.b16 %v573, %v572
        %v611 = vpack.c.b16 %v575, %v574
        %v612 = vpack.c.b16 %v577, %v576
        %v613 = vpack.c.b16 %v579, %v578
        %v614 = vpack.c.b16 %v581, %v580
        %v615 = vpack.c.b16 %v583, %v582
        %v616 = vpack.c.b16 %v585, %v584
        %v617 = vpack.c.b16 %v587, %v586
        %v618 = vpack.c.b16 %v589, %v588
        %v619 = vpack.c.b16 %v591, %v590
        %v620 = vpack.c.b16 %v593, %v592
        %v621 = vpack.c.b16 %v595, %v594
        %v622 = vpack.c.b16 %v597, %v596
        %v623 = vpack.c.b16 %v599, %v598
        %648 = vmatprep.subr.bf16.mxu0 0
        %649 = vmatpush1.bf16.msra.mxu0 %v607
        %650 = vmatprep.subr.bf16.mxu0 0
        %651 = vmatpush1.bf16.msra.mxu0 %v606
        %652 = vmatprep.subr.bf16.mxu0 0
        %653 = vmatpush1.bf16.msra.mxu0 %v605
        %654 = vmatprep.subr.bf16.mxu0 0
        %655 = vmatpush1.bf16.msra.mxu0 %v604
        %656 = vmatprep.subr.bf16.mxu0 0
        %657 = vmatpush1.bf16.msra.mxu0 %v603
        %658 = vmatprep.subr.bf16.mxu0 0
        %659 = vmatpush1.bf16.msra.mxu0 %v602
        %660 = vmatprep.subr.bf16.mxu0 0
        %661 = vmatpush1.bf16.msra.mxu0 %v601
        %662 = vmatprep.subr.bf16.mxu0 0
        %663 = vmatpush1.bf16.msra.mxu0 %v600
        %664 = vmatprep.subr.bf16.mxu0 0
        %665 = vmatpush2.bf16.msra.mxu0 %v615
        %666 = vmatprep.subr.bf16.mxu0 0
        %667 = vmatpush2.bf16.msra.mxu0 %v614
        %668 = vmatprep.subr.bf16.mxu0 0
        %669 = vmatpush2.bf16.msra.mxu0 %v613
        %670 = vmatprep.subr.bf16.mxu0 0
        %671 = vmatpush2.bf16.msra.mxu0 %v612
        %672 = vmatprep.subr.bf16.mxu0 0
        %673 = vmatpush2.bf16.msra.mxu0 %v611
        %674 = vmatprep.subr.bf16.mxu0 0
        %675 = vmatpush2.bf16.msra.mxu0 %v610
        %676 = vmatprep.subr.bf16.mxu0 0
        %677 = vmatpush2.bf16.msra.mxu0 %v609
        %678 = vmatprep.subr.bf16.mxu0 0
        %679 = vmatpush2.bf16.msra.mxu0 %v608
        %680 = vmatprep.mubr.bf16.mxu0 %v433
        %681 = vmatmul.mubr.bf16.gmra.mxu0 %v432
        %v682 = vpop.f32.mrf.mxu0
        %v683 = vadd.f32 0.0, %v682
        %v684 = vpop.f32.mrf.mxu0
        %v685 = vpop.f32.mrf.mxu0
        %v686 = vadd.f32 0.0, %v685
        %v687 = vpop.f32.mrf.mxu0
        %688 = vmatprep.mubr.bf16.mxu0 %v436
        %689 = vmatmul.mubr.bf16.gmra.mxu0 %v435
        %v690 = vpop.f32.mrf.mxu0
        %v691 = vadd.f32 0.0, %v690
        %v692 = vpop.f32.mrf.mxu0
        %v693 = vpop.f32.mrf.mxu0
        %v694 = vadd.f32 0.0, %v693
        %v695 = vpop.f32.mrf.mxu0
        %696 = vmatprep.mubr.bf16.mxu0 %v439
        %697 = vmatmul.mubr.bf16.gmra.mxu0 %v438
        %v698 = vpop.f32.mrf.mxu0
        %v699 = vadd.f32 0.0, %v698
        %v700 = vpop.f32.mrf.mxu0
        %v701 = vpop.f32.mrf.mxu0
        %v702 = vadd.f32 0.0, %v701
        %v703 = vpop.f32.mrf.mxu0
        %704 = vmatprep.mubr.bf16.mxu0 %v442
        %705 = vmatmul.mubr.bf16.gmra.mxu0 %v441
        %v706 = vpop.f32.mrf.mxu0
        %v707 = vadd.f32 0.0, %v706
        %v708 = vpop.f32.mrf.mxu0
        %v709 = vpop.f32.mrf.mxu0
        %v710 = vadd.f32 0.0, %v709
        %v711 = vpop.f32.mrf.mxu0
        %712 = vmatprep.mubr.bf16.mxu0 %v445
        %713 = vmatmul.mubr.bf16.gmra.mxu0 %v444
        %v714 = vpop.f32.mrf.mxu0
        %v715 = vadd.f32 0.0, %v714
        %v716 = vpop.f32.mrf.mxu0
        %v717 = vpop.f32.mrf.mxu0
        %v718 = vadd.f32 0.0, %v717
        %v719 = vpop.f32.mrf.mxu0
        %720 = vmatprep.mubr.bf16.mxu0 %v448
        %721 = vmatmul.mubr.bf16.gmra.mxu0 %v447
        %v722 = vpop.f32.mrf.mxu0
        %v723 = vadd.f32 0.0, %v722
        %v724 = vpop.f32.mrf.mxu0
        %v725 = vpop.f32.mrf.mxu0
        %v726 = vadd.f32 0.0, %v725
        %v727 = vpop.f32.mrf.mxu0
        %728 = vmatprep.mubr.bf16.mxu0 %v451
        %729 = vmatmul.mubr.bf16.gmra.mxu0 %v450
        %v730 = vpop.f32.mrf.mxu0
        %v731 = vadd.f32 0.0, %v730
        %v732 = vpop.f32.mrf.mxu0
        %v733 = vpop.f32.mrf.mxu0
        %v734 = vadd.f32 0.0, %v733
        %v735 = vpop.f32.mrf.mxu0
        %736 = vmatprep.mubr.bf16.mxu0 %v454
        %737 = vmatmul.mubr.bf16.gmra.mxu0 %v453
        %v738 = vpop.f32.mrf.mxu0
        %v739 = vadd.f32 0.0, %v738
        %v740 = vpop.f32.mrf.mxu0
        %v741 = vpop.f32.mrf.mxu0
        %v742 = vadd.f32 0.0, %v741
        %v743 = vpop.f32.mrf.mxu0
        %744 = vdwg.mxu0
        %745 = vmatprep.subr.bf16.mxu0 0
        %746 = vmatpush1.bf16.msra.mxu0 %v623
        %747 = vmatprep.subr.bf16.mxu0 0
        %748 = vmatpush1.bf16.msra.mxu0 %v622
        %749 = vmatprep.subr.bf16.mxu0 0
        %750 = vmatpush1.bf16.msra.mxu0 %v621
        %751 = vmatprep.subr.bf16.mxu0 0
        %752 = vmatpush1.bf16.msra.mxu0 %v620
        %753 = vmatprep.subr.bf16.mxu0 0
        %754 = vmatpush1.bf16.msra.mxu0 %v619
        %755 = vmatprep.subr.bf16.mxu0 0
        %756 = vmatpush1.bf16.msra.mxu0 %v618
        %757 = vmatprep.subr.bf16.mxu0 0
        %758 = vmatpush1.bf16.msra.mxu0 %v617
        %759 = vmatprep.subr.bf16.mxu0 0
        %760 = vmatpush1.bf16.msra.mxu0 %v616
        %761 = vmatprep.subr.bf16.mxu0 0
        %762 = vmatpush2.bf16.msra.mxu0 0
        %763 = vmatprep.subr.bf16.mxu0 0
        %764 = vmatpush2.bf16.msra.mxu0 0
        %765 = vmatprep.subr.bf16.mxu0 0
        %766 = vmatpush2.bf16.msra.mxu0 0
        %767 = vmatprep.subr.bf16.mxu0 0
        %768 = vmatpush2.bf16.msra.mxu0 0
        %769 = vmatprep.subr.bf16.mxu0 0
        %770 = vmatpush2.bf16.msra.mxu0 0
        %771 = vmatprep.subr.bf16.mxu0 0
        %772 = vmatpush2.bf16.msra.mxu0 0
        %773 = vmatprep.subr.bf16.mxu0 0
        %774 = vmatpush2.bf16.msra.mxu0 0
        %775 = vmatprep.subr.bf16.mxu0 0
        %776 = vmatpush2.bf16.msra.mxu0 0
        %777 = vmatprep.mubr.bf16.mxu0 0
        %778 = vmatmul.mubr.bf16.gmra.mxu0 %v434
        %v779 = vpop.f32.mrf.mxu0
        %v780 = vadd.f32 %v683, %v779
        %v781 = vpop.f32.mrf.mxu0
        %v782 = vpop.f32.mrf.mxu0
        %v783 = vadd.f32 %v686, %v782
        %v784 = vpop.f32.mrf.mxu0
        %785 = vmatprep.mubr.bf16.mxu0 0
        %786 = vmatmul.mubr.bf16.gmra.mxu0 %v437
        %v787 = vpop.f32.mrf.mxu0
        %v788 = vadd.f32 %v691, %v787
        %v789 = vpop.f32.mrf.mxu0
        %v790 = vpop.f32.mrf.mxu0
        %v791 = vadd.f32 %v694, %v790
        %v792 = vpop.f32.mrf.mxu0
        %793 = vmatprep.mubr.bf16.mxu0 0
        %794 = vmatmul.mubr.bf16.gmra.mxu0 %v440
        %v795 = vpop.f32.mrf.mxu0
        %v796 = vadd.f32 %v699, %v795
        %v797 = vpop.f32.mrf.mxu0
        %v798 = vpop.f32.mrf.mxu0
        %v799 = vadd.f32 %v702, %v798
        %v800 = vpop.f32.mrf.mxu0
        %801 = vmatprep.mubr.bf16.mxu0 0
        %802 = vmatmul.mubr.bf16.gmra.mxu0 %v443
        %v803 = vpop.f32.mrf.mxu0
        %v804 = vadd.f32 %v707, %v803
        %v805 = vpop.f32.mrf.mxu0
        %v806 = vpop.f32.mrf.mxu0
        %v807 = vadd.f32 %v710, %v806
        %v808 = vpop.f32.mrf.mxu0
        %809 = vmatprep.mubr.bf16.mxu0 0
        %810 = vmatmul.mubr.bf16.gmra.mxu0 %v446
        %v811 = vpop.f32.mrf.mxu0
        %v812 = vadd.f32 %v715, %v811
        %v813 = vpop.f32.mrf.mxu0
        %v814 = vpop.f32.mrf.mxu0
        %v815 = vadd.f32 %v718, %v814
        %v816 = vpop.f32.mrf.mxu0
        %817 = vmatprep.mubr.bf16.mxu0 0
        %818 = vmatmul.mubr.bf16.gmra.mxu0 %v449
        %v819 = vpop.f32.mrf.mxu0
        %v820 = vadd.f32 %v723, %v819
        %v821 = vpop.f32.mrf.mxu0
        %v822 = vpop.f32.mrf.mxu0
        %v823 = vadd.f32 %v726, %v822
        %v824 = vpop.f32.mrf.mxu0
        %825 = vmatprep.mubr.bf16.mxu0 0
        %826 = vmatmul.mubr.bf16.gmra.mxu0 %v452
        %v827 = vpop.f32.mrf.mxu0
        %v828 = vadd.f32 %v731, %v827
        %v829 = vpop.f32.mrf.mxu0
        %v830 = vpop.f32.mrf.mxu0
        %v831 = vadd.f32 %v734, %v830
        %v832 = vpop.f32.mrf.mxu0
        %833 = vmatprep.mubr.bf16.mxu0 0
        %834 = vmatmul.mubr.bf16.gmra.mxu0 %v455
        %v835 = vpop.f32.mrf.mxu0
        %v836 = vadd.f32 %v739, %v835
        %v837 = vpop.f32.mrf.mxu0
        %v838 = vpop.f32.mrf.mxu0
        %v839 = vadd.f32 %v742, %v838
        %v840 = vpop.f32.mrf.mxu0
        %841 = vdwg.mxu0
        %v842 = vmul.f32 %v780, 0.05103104
        %v843 = vmul.f32 %v783, 0.05103104
        %v844 = vmul.f32 %v788, 0.05103104
        %v845 = vmul.f32 %v791, 0.05103104
        %v846 = vmul.f32 %v796, 0.05103104
        %v847 = vmul.f32 %v799, 0.05103104
        %v848 = vmul.f32 %v804, 0.05103104
        %v849 = vmul.f32 %v807, 0.05103104
        %v850 = vmul.f32 %v812, 0.05103104
        %v851 = vmul.f32 %v815, 0.05103104
        %v852 = vmul.f32 %v820, 0.05103104
        %v853 = vmul.f32 %v823, 0.05103104
        %v854 = vmul.f32 %v828, 0.05103104
        %v855 = vmul.f32 %v831, 0.05103104
        %v856 = vmul.f32 %v836, 0.05103104
        %v857 = vmul.f32 %v839, 0.05103104
        %v858 = vld [vmem:[#allocation7] sm:$0xff]
        %v859 = vld [vmem:[#allocation7 + $0x8] sm:$0xff]
        %v860 = vld [vmem:[#allocation7 + $0x10] sm:$0xff]
        %v861 = vld [vmem:[#allocation7 + $0x18] sm:$0xff]
        %v862 = vld [vmem:[#allocation7 + $0x20] sm:$0xff]
        %v863 = vld [vmem:[#allocation7 + $0x28] sm:$0xff]
        %v864 = vld [vmem:[#allocation7 + $0x30] sm:$0xff]
        %v865 = vld [vmem:[#allocation7 + $0x38] sm:$0xff]
        %v866 = vld [vmem:[#allocation7 + $0x40] sm:$0xff]
        %v867 = vld [vmem:[#allocation7 + $0x48] sm:$0xff]
        %v868 = vld [vmem:[#allocation7 + $0x50] sm:$0xff]
        %v869 = vld [vmem:[#allocation7 + $0x58] sm:$0xff]
        %v870 = vld [vmem:[#allocation7 + $0x60] sm:$0xff]
        %v871 = vld [vmem:[#allocation7 + $0x68] sm:$0xff]
        %v872 = vld [vmem:[#allocation7 + $0x70] sm:$0xff]
        %v873 = vld [vmem:[#allocation7 + $0x78] sm:$0xff]
        %v874 = vld [vmem:[#allocation7 + $0x80] sm:$0xff]
        %v875 = vld [vmem:[#allocation7 + $0x88] sm:$0xff]
        %v876 = vld [vmem:[#allocation7 + $0x90] sm:$0xff]
        %v877 = vld [vmem:[#allocation7 + $0x98] sm:$0xff]
        %v878 = vld [vmem:[#allocation7 + $0xa0] sm:$0xff]
        %v879 = vld [vmem:[#allocation7 + $0xa8] sm:$0xff]
        %v880 = vld [vmem:[#allocation7 + $0xb0] sm:$0xff]
        %v881 = vld [vmem:[#allocation7 + $0xb8] sm:$0xff]
        %v882 = vld [vmem:[#allocation7 + $0xc0] sm:$0xff]
        %v883 = vld [vmem:[#allocation7 + $0xc8] sm:$0xff]
        %v884 = vld [vmem:[#allocation7 + $0xd0] sm:$0xff]
        %v885 = vld [vmem:[#allocation7 + $0xd8] sm:$0xff]
        %v886 = vld [vmem:[#allocation7 + $0xe0] sm:$0xff]
        %v887 = vld [vmem:[#allocation7 + $0xe8] sm:$0xff]
        %v888 = vld [vmem:[#allocation7 + $0xf0] sm:$0xff]
        %v889 = vld [vmem:[#allocation7 + $0xf8] sm:$0xff]
        %v890 = vld [vmem:[#allocation7 + $0x100] sm:$0xff]
        %v891 = vld [vmem:[#allocation7 + $0x108] sm:$0xff]
        %v892 = vld [vmem:[#allocation7 + $0x110] sm:$0xff]
        %v893 = vld [vmem:[#allocation7 + $0x118] sm:$0xff]
        %v894 = vld [vmem:[#allocation7 + $0x120] sm:$0xff]
        %v895 = vld [vmem:[#allocation7 + $0x128] sm:$0xff]
        %v896 = vld [vmem:[#allocation7 + $0x130] sm:$0xff]
        %v897 = vld [vmem:[#allocation7 + $0x138] sm:$0xff]
        %v898 = vld [vmem:[#allocation7 + $0x140] sm:$0xff]
        %v899 = vld [vmem:[#allocation7 + $0x148] sm:$0xff]
        %v900 = vld [vmem:[#allocation7 + $0x150] sm:$0xff]
        %v901 = vld [vmem:[#allocation7 + $0x158] sm:$0xff]
        %v902 = vld [vmem:[#allocation7 + $0x160] sm:$0xff]
        %v903 = vld [vmem:[#allocation7 + $0x168] sm:$0xff]
        %v904 = vld [vmem:[#allocation7 + $0x170] sm:$0xff]
        %v905 = vld [vmem:[#allocation7 + $0x178] sm:$0xff]
        %v954 = vunpack.c.l.b16 %v858
        %v955 = vunpack.c.h.b16 %v858
        %v956 = vunpack.c.l.b16 %v859
        %v957 = vunpack.c.h.b16 %v859
        %v958 = vunpack.c.l.b16 %v860
        %v959 = vunpack.c.h.b16 %v860
        %v960 = vunpack.c.l.b16 %v861
        %v961 = vunpack.c.h.b16 %v861
        %v962 = vunpack.c.l.b16 %v862
        %v963 = vunpack.c.h.b16 %v862
        %v964 = vunpack.c.l.b16 %v863
        %v965 = vunpack.c.h.b16 %v863
        %v966 = vunpack.c.l.b16 %v864
        %v967 = vunpack.c.h.b16 %v864
        %v968 = vunpack.c.l.b16 %v865
        %v969 = vunpack.c.h.b16 %v865
        %v970 = vunpack.c.l.b16 %v866
        %v971 = vunpack.c.h.b16 %v866
        %v972 = vunpack.c.l.b16 %v867
        %v973 = vunpack.c.h.b16 %v867
        %v974 = vunpack.c.l.b16 %v868
        %v975 = vunpack.c.h.b16 %v868
        %v976 = vunpack.c.l.b16 %v869
        %v977 = vunpack.c.h.b16 %v869
        %v978 = vunpack.c.l.b16 %v870
        %v979 = vunpack.c.h.b16 %v870
        %v980 = vunpack.c.l.b16 %v871
        %v981 = vunpack.c.h.b16 %v871
        %v982 = vunpack.c.l.b16 %v872
        %v983 = vunpack.c.h.b16 %v872
        %v984 = vunpack.c.l.b16 %v873
        %v985 = vunpack.c.h.b16 %v873
        %v986 = vunpack.c.l.b16 %v874
        %v987 = vunpack.c.h.b16 %v874
        %v988 = vunpack.c.l.b16 %v875
        %v989 = vunpack.c.h.b16 %v875
        %v990 = vunpack.c.l.b16 %v876
        %v991 = vunpack.c.h.b16 %v876
        %v992 = vunpack.c.l.b16 %v877
        %v993 = vunpack.c.h.b16 %v877
        %v994 = vunpack.c.l.b16 %v878
        %v995 = vunpack.c.h.b16 %v878
        %v996 = vunpack.c.l.b16 %v879
        %v997 = vunpack.c.h.b16 %v879
        %v998 = vunpack.c.l.b16 %v880
        %v999 = vunpack.c.h.b16 %v880
        %v1000 = vunpack.c.l.b16 %v881
        %v1001 = vunpack.c.h.b16 %v881
        %v1002 = vunpack.c.l.b16 %v882
        %v1003 = vunpack.c.h.b16 %v882
        %v1004 = vunpack.c.l.b16 %v883
        %v1005 = vunpack.c.h.b16 %v883
        %v1006 = vunpack.c.l.b16 %v884
        %v1007 = vunpack.c.h.b16 %v884
        %v1008 = vunpack.c.l.b16 %v885
        %v1009 = vunpack.c.h.b16 %v885
        %v1010 = vunpack.c.l.b16 %v886
        %v1011 = vunpack.c.h.b16 %v886
        %v1012 = vunpack.c.l.b16 %v887
        %v1013 = vunpack.c.h.b16 %v887
        %v1014 = vunpack.c.l.b16 %v888
        %v1015 = vunpack.c.h.b16 %v888
        %v1016 = vunpack.c.l.b16 %v889
        %v1017 = vunpack.c.h.b16 %v889
        %v1018 = vunpack.c.l.b16 %v890
        %v1019 = vunpack.c.h.b16 %v890
        %v1020 = vunpack.c.l.b16 %v891
        %v1021 = vunpack.c.h.b16 %v891
        %v1022 = vunpack.c.l.b16 %v892
        %v1023 = vunpack.c.h.b16 %v892
        %v1024 = vunpack.c.l.b16 %v893
        %v1025 = vunpack.c.h.b16 %v893
        %v1026 = vunpack.c.l.b16 %v894
        %v1027 = vunpack.c.h.b16 %v894
        %v1028 = vunpack.c.l.b16 %v895
        %v1029 = vunpack.c.h.b16 %v895
        %v1030 = vunpack.c.l.b16 %v896
        %v1031 = vunpack.c.h.b16 %v896
        %v1032 = vunpack.c.l.b16 %v897
        %v1033 = vunpack.c.h.b16 %v897
        %v1034 = vunpack.c.l.b16 %v898
        %v1035 = vunpack.c.h.b16 %v898
        %v1036 = vunpack.c.l.b16 %v899
        %v1037 = vunpack.c.h.b16 %v899
        %v1038 = vunpack.c.l.b16 %v900
        %v1039 = vunpack.c.h.b16 %v900
        %v1040 = vunpack.c.l.b16 %v901
        %v1041 = vunpack.c.h.b16 %v901
        %v1042 = vunpack.c.l.b16 %v902
        %v1043 = vunpack.c.h.b16 %v902
        %v1044 = vunpack.c.l.b16 %v903
        %v1045 = vunpack.c.h.b16 %v903
        %v1046 = vunpack.c.l.b16 %v904
        %v1047 = vunpack.c.h.b16 %v904
        %v1048 = vunpack.c.l.b16 %v905
        %v1049 = vunpack.c.h.b16 %v905
        %v1050 = vpack.c.b16 %v956, %v954
        %v1051 = vpack.c.b16 %v957, %v955
        %v1052 = vpack.c.b16 %v960, %v958
        %v1053 = vpack.c.b16 %v961, %v959
        %v1054 = vpack.c.b16 %v964, %v962
        %v1055 = vpack.c.b16 %v965, %v963
        %v1056 = vpack.c.b16 %v968, %v966
        %v1057 = vpack.c.b16 %v969, %v967
        %v1058 = vpack.c.b16 %v972, %v970
        %v1059 = vpack.c.b16 %v973, %v971
        %v1060 = vpack.c.b16 %v976, %v974
        %v1061 = vpack.c.b16 %v977, %v975
        %v1062 = vpack.c.b16 %v980, %v978
        %v1063 = vpack.c.b16 %v981, %v979
        %v1064 = vpack.c.b16 %v984, %v982
        %v1065 = vpack.c.b16 %v985, %v983
        %v1066 = vpack.c.b16 %v988, %v986
        %v1067 = vpack.c.b16 %v989, %v987
        %v1068 = vpack.c.b16 %v992, %v990
        %v1069 = vpack.c.b16 %v993, %v991
        %v1070 = vpack.c.b16 %v996, %v994
        %v1071 = vpack.c.b16 %v997, %v995
        %v1072 = vpack.c.b16 %v1000, %v998
        %v1073 = vpack.c.b16 %v1001, %v999
        %v1074 = vpack.c.b16 %v1004, %v1002
        %v1075 = vpack.c.b16 %v1005, %v1003
        %v1076 = vpack.c.b16 %v1008, %v1006
        %v1077 = vpack.c.b16 %v1009, %v1007
        %v1078 = vpack.c.b16 %v1012, %v1010
        %v1079 = vpack.c.b16 %v1013, %v1011
        %v1080 = vpack.c.b16 %v1016, %v1014
        %v1081 = vpack.c.b16 %v1017, %v1015
        %v1082 = vpack.c.b16 %v1020, %v1018
        %v1083 = vpack.c.b16 %v1021, %v1019
        %v1084 = vpack.c.b16 %v1024, %v1022
        %v1085 = vpack.c.b16 %v1025, %v1023
        %v1086 = vpack.c.b16 %v1028, %v1026
        %v1087 = vpack.c.b16 %v1029, %v1027
        %v1088 = vpack.c.b16 %v1032, %v1030
        %v1089 = vpack.c.b16 %v1033, %v1031
        %v1090 = vpack.c.b16 %v1036, %v1034
        %v1091 = vpack.c.b16 %v1037, %v1035
        %v1092 = vpack.c.b16 %v1040, %v1038
        %v1093 = vpack.c.b16 %v1041, %v1039
        %v1094 = vpack.c.b16 %v1044, %v1042
        %v1095 = vpack.c.b16 %v1045, %v1043
        %v1096 = vpack.c.b16 %v1048, %v1046
        %v1097 = vpack.c.b16 %v1049, %v1047
        %1146 = vmatprep.subr.bf16.mxu0 %v1065
        %1147 = vmatpush1.bf16.msra.mxu0 %v1064
        %1148 = vmatprep.subr.bf16.mxu0 %v1063
        %1149 = vmatpush1.bf16.msra.mxu0 %v1062
        %1150 = vmatprep.subr.bf16.mxu0 %v1061
        %1151 = vmatpush1.bf16.msra.mxu0 %v1060
        %1152 = vmatprep.subr.bf16.mxu0 %v1059
        %1153 = vmatpush1.bf16.msra.mxu0 %v1058
        %1154 = vmatprep.subr.bf16.mxu0 %v1057
        %1155 = vmatpush1.bf16.msra.mxu0 %v1056
        %1156 = vmatprep.subr.bf16.mxu0 %v1055
        %1157 = vmatpush1.bf16.msra.mxu0 %v1054
        %1158 = vmatprep.subr.bf16.mxu0 %v1053
        %1159 = vmatpush1.bf16.msra.mxu0 %v1052
        %1160 = vmatprep.subr.bf16.mxu0 %v1051
        %1161 = vmatpush1.bf16.msra.mxu0 %v1050
        %1162 = vmatprep.subr.bf16.mxu0 %v1081
        %1163 = vmatpush2.bf16.msra.mxu0 %v1080
        %1164 = vmatprep.subr.bf16.mxu0 %v1079
        %1165 = vmatpush2.bf16.msra.mxu0 %v1078
        %1166 = vmatprep.subr.bf16.mxu0 %v1077
        %1167 = vmatpush2.bf16.msra.mxu0 %v1076
        %1168 = vmatprep.subr.bf16.mxu0 %v1075
        %1169 = vmatpush2.bf16.msra.mxu0 %v1074
        %1170 = vmatprep.subr.bf16.mxu0 %v1073
        %1171 = vmatpush2.bf16.msra.mxu0 %v1072
        %1172 = vmatprep.subr.bf16.mxu0 %v1071
        %1173 = vmatpush2.bf16.msra.mxu0 %v1070
        %1174 = vmatprep.subr.bf16.mxu0 %v1069
        %1175 = vmatpush2.bf16.msra.mxu0 %v1068
        %1176 = vmatprep.subr.bf16.mxu0 %v1067
        %1177 = vmatpush2.bf16.msra.mxu0 %v1066
        %1178 = vmatprep.mubr.bf16.mxu0 %v332
        %1179 = vmatmul.mubr.bf16.gmra.mxu0 %v331
        %v1180 = vpop.f32.mrf.mxu0
        %v1181 = vadd.f32 0.0, %v1180
        %v1182 = vpop.f32.mrf.mxu0
        %v1183 = vadd.f32 0.0, %v1182
        %v1184 = vpop.f32.mrf.mxu0
        %v1185 = vadd.f32 0.0, %v1184
        %v1186 = vpop.f32.mrf.mxu0
        %v1187 = vadd.f32 0.0, %v1186
        %1188 = vmatprep.mubr.bf16.mxu0 %v335
        %1189 = vmatmul.mubr.bf16.gmra.mxu0 %v334
        %v1190 = vpop.f32.mrf.mxu0
        %v1191 = vadd.f32 0.0, %v1190
        %v1192 = vpop.f32.mrf.mxu0
        %v1193 = vadd.f32 0.0, %v1192
        %v1194 = vpop.f32.mrf.mxu0
        %v1195 = vadd.f32 0.0, %v1194
        %v1196 = vpop.f32.mrf.mxu0
        %v1197 = vadd.f32 0.0, %v1196
        %1198 = vmatprep.mubr.bf16.mxu0 %v338
        %1199 = vmatmul.mubr.bf16.gmra.mxu0 %v337
        %v1200 = vpop.f32.mrf.mxu0
        %v1201 = vadd.f32 0.0, %v1200
        %v1202 = vpop.f32.mrf.mxu0
        %v1203 = vadd.f32 0.0, %v1202
        %v1204 = vpop.f32.mrf.mxu0
        %v1205 = vadd.f32 0.0, %v1204
        %v1206 = vpop.f32.mrf.mxu0
        %v1207 = vadd.f32 0.0, %v1206
        %1208 = vmatprep.mubr.bf16.mxu0 %v341
        %1209 = vmatmul.mubr.bf16.gmra.mxu0 %v340
        %v1210 = vpop.f32.mrf.mxu0
        %v1211 = vadd.f32 0.0, %v1210
        %v1212 = vpop.f32.mrf.mxu0
        %v1213 = vadd.f32 0.0, %v1212
        %v1214 = vpop.f32.mrf.mxu0
        %v1215 = vadd.f32 0.0, %v1214
        %v1216 = vpop.f32.mrf.mxu0
        %v1217 = vadd.f32 0.0, %v1216
        %1218 = vmatprep.mubr.bf16.mxu0 %v344
        %1219 = vmatmul.mubr.bf16.gmra.mxu0 %v343
        %v1220 = vpop.f32.mrf.mxu0
        %v1221 = vadd.f32 0.0, %v1220
        %v1222 = vpop.f32.mrf.mxu0
        %v1223 = vadd.f32 0.0, %v1222
        %v1224 = vpop.f32.mrf.mxu0
        %v1225 = vadd.f32 0.0, %v1224
        %v1226 = vpop.f32.mrf.mxu0
        %v1227 = vadd.f32 0.0, %v1226
        %1228 = vmatprep.mubr.bf16.mxu0 %v347
        %1229 = vmatmul.mubr.bf16.gmra.mxu0 %v346
        %v1230 = vpop.f32.mrf.mxu0
        %v1231 = vadd.f32 0.0, %v1230
        %v1232 = vpop.f32.mrf.mxu0
        %v1233 = vadd.f32 0.0, %v1232
        %v1234 = vpop.f32.mrf.mxu0
        %v1235 = vadd.f32 0.0, %v1234
        %v1236 = vpop.f32.mrf.mxu0
        %v1237 = vadd.f32 0.0, %v1236
        %1238 = vmatprep.mubr.bf16.mxu0 %v350
        %1239 = vmatmul.mubr.bf16.gmra.mxu0 %v349
        %v1240 = vpop.f32.mrf.mxu0
        %v1241 = vadd.f32 0.0, %v1240
        %v1242 = vpop.f32.mrf.mxu0
        %v1243 = vadd.f32 0.0, %v1242
        %v1244 = vpop.f32.mrf.mxu0
        %v1245 = vadd.f32 0.0, %v1244
        %v1246 = vpop.f32.mrf.mxu0
        %v1247 = vadd.f32 0.0, %v1246
        %1248 = vmatprep.mubr.bf16.mxu0 %v353
        %1249 = vmatmul.mubr.bf16.gmra.mxu0 %v352
        %v1250 = vpop.f32.mrf.mxu0
        %v1251 = vadd.f32 0.0, %v1250
        %v1252 = vpop.f32.mrf.mxu0
        %v1253 = vadd.f32 0.0, %v1252
        %v1254 = vpop.f32.mrf.mxu0
        %v1255 = vadd.f32 0.0, %v1254
        %v1256 = vpop.f32.mrf.mxu0
        %v1257 = vadd.f32 0.0, %v1256
        %1258 = vmatprep.mubr.bf16.mxu0 %v356
        %1259 = vmatmul.mubr.bf16.gmra.mxu0 %v355
        %v1260 = vpop.f32.mrf.mxu0
        %v1261 = vadd.f32 0.0, %v1260
        %v1262 = vpop.f32.mrf.mxu0
        %v1263 = vadd.f32 0.0, %v1262
        %v1264 = vpop.f32.mrf.mxu0
        %v1265 = vadd.f32 0.0, %v1264
        %v1266 = vpop.f32.mrf.mxu0
        %v1267 = vadd.f32 0.0, %v1266
        %1268 = vmatprep.mubr.bf16.mxu0 %v359
        %1269 = vmatmul.mubr.bf16.gmra.mxu0 %v358
        %v1270 = vpop.f32.mrf.mxu0
        %v1271 = vadd.f32 0.0, %v1270
        %v1272 = vpop.f32.mrf.mxu0
        %v1273 = vadd.f32 0.0, %v1272
        %v1274 = vpop.f32.mrf.mxu0
        %v1275 = vadd.f32 0.0, %v1274
        %v1276 = vpop.f32.mrf.mxu0
        %v1277 = vadd.f32 0.0, %v1276
        %1278 = vmatprep.mubr.bf16.mxu0 %v362
        %1279 = vmatmul.mubr.bf16.gmra.mxu0 %v361
        %v1280 = vpop.f32.mrf.mxu0
        %v1281 = vadd.f32 0.0, %v1280
        %v1282 = vpop.f32.mrf.mxu0
        %v1283 = vadd.f32 0.0, %v1282
        %v1284 = vpop.f32.mrf.mxu0
        %v1285 = vadd.f32 0.0, %v1284
        %v1286 = vpop.f32.mrf.mxu0
        %v1287 = vadd.f32 0.0, %v1286
        %1288 = vmatprep.mubr.bf16.mxu0 %v365
        %1289 = vmatmul.mubr.bf16.gmra.mxu0 %v364
        %v1290 = vpop.f32.mrf.mxu0
        %v1291 = vadd.f32 0.0, %v1290
        %v1292 = vpop.f32.mrf.mxu0
        %v1293 = vadd.f32 0.0, %v1292
        %v1294 = vpop.f32.mrf.mxu0
        %v1295 = vadd.f32 0.0, %v1294
        %v1296 = vpop.f32.mrf.mxu0
        %v1297 = vadd.f32 0.0, %v1296
        %1298 = vmatprep.mubr.bf16.mxu0 %v368
        %1299 = vmatmul.mubr.bf16.gmra.mxu0 %v367
        %v1300 = vpop.f32.mrf.mxu0
        %v1301 = vadd.f32 0.0, %v1300
        %v1302 = vpop.f32.mrf.mxu0
        %v1303 = vadd.f32 0.0, %v1302
        %v1304 = vpop.f32.mrf.mxu0
        %v1305 = vadd.f32 0.0, %v1304
        %v1306 = vpop.f32.mrf.mxu0
        %v1307 = vadd.f32 0.0, %v1306
        %1308 = vmatprep.mubr.bf16.mxu0 %v371
        %1309 = vmatmul.mubr.bf16.gmra.mxu0 %v370
        %v1310 = vpop.f32.mrf.mxu0
        %v1311 = vadd.f32 0.0, %v1310
        %v1312 = vpop.f32.mrf.mxu0
        %v1313 = vadd.f32 0.0, %v1312
        %v1314 = vpop.f32.mrf.mxu0
        %v1315 = vadd.f32 0.0, %v1314
        %v1316 = vpop.f32.mrf.mxu0
        %v1317 = vadd.f32 0.0, %v1316
        %1318 = vmatprep.mubr.bf16.mxu0 %v374
        %1319 = vmatmul.mubr.bf16.gmra.mxu0 %v373
        %v1320 = vpop.f32.mrf.mxu0
        %v1321 = vadd.f32 0.0, %v1320
        %v1322 = vpop.f32.mrf.mxu0
        %v1323 = vadd.f32 0.0, %v1322
        %v1324 = vpop.f32.mrf.mxu0
        %v1325 = vadd.f32 0.0, %v1324
        %v1326 = vpop.f32.mrf.mxu0
        %v1327 = vadd.f32 0.0, %v1326
        %1328 = vmatprep.mubr.bf16.mxu0 %v377
        %1329 = vmatmul.mubr.bf16.gmra.mxu0 %v376
        %v1330 = vpop.f32.mrf.mxu0
        %v1331 = vadd.f32 0.0, %v1330
        %v1332 = vpop.f32.mrf.mxu0
        %v1333 = vadd.f32 0.0, %v1332
        %v1334 = vpop.f32.mrf.mxu0
        %v1335 = vadd.f32 0.0, %v1334
        %v1336 = vpop.f32.mrf.mxu0
        %v1337 = vadd.f32 0.0, %v1336
        %1338 = vdwg.mxu0
        %1339 = vmatprep.subr.bf16.mxu0 %v1097
        %1340 = vmatpush1.bf16.msra.mxu0 %v1096
        %1341 = vmatprep.subr.bf16.mxu0 %v1095
        %1342 = vmatpush1.bf16.msra.mxu0 %v1094
        %1343 = vmatprep.subr.bf16.mxu0 %v1093
        %1344 = vmatpush1.bf16.msra.mxu0 %v1092
        %1345 = vmatprep.subr.bf16.mxu0 %v1091
        %1346 = vmatpush1.bf16.msra.mxu0 %v1090
        %1347 = vmatprep.subr.bf16.mxu0 %v1089
        %1348 = vmatpush1.bf16.msra.mxu0 %v1088
        %1349 = vmatprep.subr.bf16.mxu0 %v1087
        %1350 = vmatpush1.bf16.msra.mxu0 %v1086
        %1351 = vmatprep.subr.bf16.mxu0 %v1085
        %1352 = vmatpush1.bf16.msra.mxu0 %v1084
        %1353 = vmatprep.subr.bf16.mxu0 %v1083
        %1354 = vmatpush1.bf16.msra.mxu0 %v1082
        %1355 = vmatprep.subr.bf16.mxu0 0
        %1356 = vmatpush2.bf16.msra.mxu0 0
        %1357 = vmatprep.subr.bf16.mxu0 0
        %1358 = vmatpush2.bf16.msra.mxu0 0
        %1359 = vmatprep.subr.bf16.mxu0 0
        %1360 = vmatpush2.bf16.msra.mxu0 0
        %1361 = vmatprep.subr.bf16.mxu0 0
        %1362 = vmatpush2.bf16.msra.mxu0 0
        %1363 = vmatprep.subr.bf16.mxu0 0
        %1364 = vmatpush2.bf16.msra.mxu0 0
        %1365 = vmatprep.subr.bf16.mxu0 0
        %1366 = vmatpush2.bf16.msra.mxu0 0
        %1367 = vmatprep.subr.bf16.mxu0 0
        %1368 = vmatpush2.bf16.msra.mxu0 0
        %1369 = vmatprep.subr.bf16.mxu0 0
        %1370 = vmatpush2.bf16.msra.mxu0 0
        %1371 = vmatprep.mubr.bf16.mxu0 0
        %1372 = vmatmul.mubr.bf16.gmra.mxu0 %v333
        %v1373 = vpop.f32.mrf.mxu0
        %v1374 = vadd.f32 %v1181, %v1373
        %v1375 = vpop.f32.mrf.mxu0
        %v1376 = vadd.f32 %v1183, %v1375
        %v1377 = vpop.f32.mrf.mxu0
        %v1378 = vadd.f32 %v1185, %v1377
        %v1379 = vpop.f32.mrf.mxu0
        %v1380 = vadd.f32 %v1187, %v1379
        %1381 = vmatprep.mubr.bf16.mxu0 0
        %1382 = vmatmul.mubr.bf16.gmra.mxu0 %v336
        %v1383 = vpop.f32.mrf.mxu0
        %v1384 = vadd.f32 %v1191, %v1383
        %v1385 = vpop.f32.mrf.mxu0
        %v1386 = vadd.f32 %v1193, %v1385
        %v1387 = vpop.f32.mrf.mxu0
        %v1388 = vadd.f32 %v1195, %v1387
        %v1389 = vpop.f32.mrf.mxu0
        %v1390 = vadd.f32 %v1197, %v1389
        %1391 = vmatprep.mubr.bf16.mxu0 0
        %1392 = vmatmul.mubr.bf16.gmra.mxu0 %v339
        %v1393 = vpop.f32.mrf.mxu0
        %v1394 = vadd.f32 %v1201, %v1393
        %v1395 = vpop.f32.mrf.mxu0
        %v1396 = vadd.f32 %v1203, %v1395
        %v1397 = vpop.f32.mrf.mxu0
        %v1398 = vadd.f32 %v1205, %v1397
        %v1399 = vpop.f32.mrf.mxu0
        %v1400 = vadd.f32 %v1207, %v1399
        %1401 = vmatprep.mubr.bf16.mxu0 0
        %1402 = vmatmul.mubr.bf16.gmra.mxu0 %v342
        %v1403 = vpop.f32.mrf.mxu0
        %v1404 = vadd.f32 %v1211, %v1403
        %v1405 = vpop.f32.mrf.mxu0
        %v1406 = vadd.f32 %v1213, %v1405
        %v1407 = vpop.f32.mrf.mxu0
        %v1408 = vadd.f32 %v1215, %v1407
        %v1409 = vpop.f32.mrf.mxu0
        %v1410 = vadd.f32 %v1217, %v1409
        %1411 = vmatprep.mubr.bf16.mxu0 0
        %1412 = vmatmul.mubr.bf16.gmra.mxu0 %v345
        %v1413 = vpop.f32.mrf.mxu0
        %v1414 = vadd.f32 %v1221, %v1413
        %v1415 = vpop.f32.mrf.mxu0
        %v1416 = vadd.f32 %v1223, %v1415
        %v1417 = vpop.f32.mrf.mxu0
        %v1418 = vadd.f32 %v1225, %v1417
        %v1419 = vpop.f32.mrf.mxu0
        %v1420 = vadd.f32 %v1227, %v1419
        %1421 = vmatprep.mubr.bf16.mxu0 0
        %1422 = vmatmul.mubr.bf16.gmra.mxu0 %v348
        %v1423 = vpop.f32.mrf.mxu0
        %v1424 = vadd.f32 %v1231, %v1423
        %v1425 = vpop.f32.mrf.mxu0
        %v1426 = vadd.f32 %v1233, %v1425
        %v1427 = vpop.f32.mrf.mxu0
        %v1428 = vadd.f32 %v1235, %v1427
        %v1429 = vpop.f32.mrf.mxu0
        %v1430 = vadd.f32 %v1237, %v1429
        %1431 = vmatprep.mubr.bf16.mxu0 0
        %1432 = vmatmul.mubr.bf16.gmra.mxu0 %v351
        %v1433 = vpop.f32.mrf.mxu0
        %v1434 = vadd.f32 %v1241, %v1433
        %v1435 = vpop.f32.mrf.mxu0
        %v1436 = vadd.f32 %v1243, %v1435
        %v1437 = vpop.f32.mrf.mxu0
        %v1438 = vadd.f32 %v1245, %v1437
        %v1439 = vpop.f32.mrf.mxu0
        %v1440 = vadd.f32 %v1247, %v1439
        %1441 = vmatprep.mubr.bf16.mxu0 0
        %1442 = vmatmul.mubr.bf16.gmra.mxu0 %v354
        %v1443 = vpop.f32.mrf.mxu0
        %v1444 = vadd.f32 %v1251, %v1443
        %v1445 = vpop.f32.mrf.mxu0
        %v1446 = vadd.f32 %v1253, %v1445
        %v1447 = vpop.f32.mrf.mxu0
        %v1448 = vadd.f32 %v1255, %v1447
        %v1449 = vpop.f32.mrf.mxu0
        %v1450 = vadd.f32 %v1257, %v1449
        %1451 = vmatprep.mubr.bf16.mxu0 0
        %1452 = vmatmul.mubr.bf16.gmra.mxu0 %v357
        %v1453 = vpop.f32.mrf.mxu0
        %v1454 = vadd.f32 %v1261, %v1453
        %v1455 = vpop.f32.mrf.mxu0
        %v1456 = vadd.f32 %v1263, %v1455
        %v1457 = vpop.f32.mrf.mxu0
        %v1458 = vadd.f32 %v1265, %v1457
        %v1459 = vpop.f32.mrf.mxu0
        %v1460 = vadd.f32 %v1267, %v1459
        %1461 = vmatprep.mubr.bf16.mxu0 0
        %1462 = vmatmul.mubr.bf16.gmra.mxu0 %v360
        %v1463 = vpop.f32.mrf.mxu0
        %v1464 = vadd.f32 %v1271, %v1463
        %v1465 = vpop.f32.mrf.mxu0
        %v1466 = vadd.f32 %v1273, %v1465
        %v1467 = vpop.f32.mrf.mxu0
        %v1468 = vadd.f32 %v1275, %v1467
        %v1469 = vpop.f32.mrf.mxu0
        %v1470 = vadd.f32 %v1277, %v1469
        %1471 = vmatprep.mubr.bf16.mxu0 0
        %1472 = vmatmul.mubr.bf16.gmra.mxu0 %v363
        %v1473 = vpop.f32.mrf.mxu0
        %v1474 = vadd.f32 %v1281, %v1473
        %v1475 = vpop.f32.mrf.mxu0
        %v1476 = vadd.f32 %v1283, %v1475
        %v1477 = vpop.f32.mrf.mxu0
        %v1478 = vadd.f32 %v1285, %v1477
        %v1479 = vpop.f32.mrf.mxu0
        %v1480 = vadd.f32 %v1287, %v1479
        %1481 = vmatprep.mubr.bf16.mxu0 0
        %1482 = vmatmul.mubr.bf16.gmra.mxu0 %v366
        %v1483 = vpop.f32.mrf.mxu0
        %v1484 = vadd.f32 %v1291, %v1483
        %v1485 = vpop.f32.mrf.mxu0
        %v1486 = vadd.f32 %v1293, %v1485
        %v1487 = vpop.f32.mrf.mxu0
        %v1488 = vadd.f32 %v1295, %v1487
        %v1489 = vpop.f32.mrf.mxu0
        %v1490 = vadd.f32 %v1297, %v1489
        %1491 = vmatprep.mubr.bf16.mxu0 0
        %1492 = vmatmul.mubr.bf16.gmra.mxu0 %v369
        %v1493 = vpop.f32.mrf.mxu0
        %v1494 = vadd.f32 %v1301, %v1493
        %v1495 = vpop.f32.mrf.mxu0
        %v1496 = vadd.f32 %v1303, %v1495
        %v1497 = vpop.f32.mrf.mxu0
        %v1498 = vadd.f32 %v1305, %v1497
        %v1499 = vpop.f32.mrf.mxu0
        %v1500 = vadd.f32 %v1307, %v1499
        %1501 = vmatprep.mubr.bf16.mxu0 0
        %1502 = vmatmul.mubr.bf16.gmra.mxu0 %v372
        %v1503 = vpop.f32.mrf.mxu0
        %v1504 = vadd.f32 %v1311, %v1503
        %v1505 = vpop.f32.mrf.mxu0
        %v1506 = vadd.f32 %v1313, %v1505
        %v1507 = vpop.f32.mrf.mxu0
        %v1508 = vadd.f32 %v1315, %v1507
        %v1509 = vpop.f32.mrf.mxu0
        %v1510 = vadd.f32 %v1317, %v1509
        %1511 = vmatprep.mubr.bf16.mxu0 0
        %1512 = vmatmul.mubr.bf16.gmra.mxu0 %v375
        %v1513 = vpop.f32.mrf.mxu0
        %v1514 = vadd.f32 %v1321, %v1513
        %v1515 = vpop.f32.mrf.mxu0
        %v1516 = vadd.f32 %v1323, %v1515
        %v1517 = vpop.f32.mrf.mxu0
        %v1518 = vadd.f32 %v1325, %v1517
        %v1519 = vpop.f32.mrf.mxu0
        %v1520 = vadd.f32 %v1327, %v1519
        %1521 = vmatprep.mubr.bf16.mxu0 0
        %1522 = vmatmul.mubr.bf16.gmra.mxu0 %v378
        %v1523 = vpop.f32.mrf.mxu0
        %v1524 = vadd.f32 %v1331, %v1523
        %v1525 = vpop.f32.mrf.mxu0
        %v1526 = vadd.f32 %v1333, %v1525
        %v1527 = vpop.f32.mrf.mxu0
        %v1528 = vadd.f32 %v1335, %v1527
        %v1529 = vpop.f32.mrf.mxu0
        %v1530 = vadd.f32 %v1337, %v1529
        %1531 = vdwg.mxu0
        %v1532 = vpack.c.bf16 %v843, %v842
        %v1533 = vpack.c.bf16 %v845, %v844
        %v1534 = vpack.c.bf16 %v847, %v846
        %v1535 = vpack.c.bf16 %v849, %v848
        %v1536 = vpack.c.bf16 %v851, %v850
        %v1537 = vpack.c.bf16 %v853, %v852
        %v1538 = vpack.c.bf16 %v855, %v854
        %v1539 = vpack.c.bf16 %v857, %v856
        %v1540 = vpack.c.bf16 %v1378, %v1374
        %v1541 = vpack.c.bf16 %v1388, %v1384
        %v1542 = vpack.c.bf16 %v1398, %v1394
        %v1543 = vpack.c.bf16 %v1408, %v1404
        %v1544 = vpack.c.bf16 %v1418, %v1414
        %v1545 = vpack.c.bf16 %v1428, %v1424
        %v1546 = vpack.c.bf16 %v1438, %v1434
        %v1547 = vpack.c.bf16 %v1448, %v1444
        %v1548 = vpack.c.bf16 %v1458, %v1454
        %v1549 = vpack.c.bf16 %v1468, %v1464
        %v1550 = vpack.c.bf16 %v1478, %v1474
        %v1551 = vpack.c.bf16 %v1488, %v1484
        %v1552 = vpack.c.bf16 %v1498, %v1494
        %v1553 = vpack.c.bf16 %v1508, %v1504
        %v1554 = vpack.c.bf16 %v1518, %v1514
        %v1555 = vpack.c.bf16 %v1528, %v1524
        %1556 = vmatprep.subr.bf16.mxu0 0
        %1557 = vmatpush1.bf16.xpose.msra.mxu0 %v1547
        %1558 = vmatprep.subr.bf16.mxu0 0
        %1559 = vmatpush1.bf16.xpose.msra.mxu0 %v1546
        %1560 = vmatprep.subr.bf16.mxu0 0
        %1561 = vmatpush1.bf16.xpose.msra.mxu0 %v1545
        %1562 = vmatprep.subr.bf16.mxu0 0
        %1563 = vmatpush1.bf16.xpose.msra.mxu0 %v1544
        %1564 = vmatprep.subr.bf16.mxu0 0
        %1565 = vmatpush1.bf16.xpose.msra.mxu0 %v1543
        %1566 = vmatprep.subr.bf16.mxu0 0
        %1567 = vmatpush1.bf16.xpose.msra.mxu0 %v1542
        %1568 = vmatprep.subr.bf16.mxu0 0
        %1569 = vmatpush1.bf16.xpose.msra.mxu0 %v1541
        %1570 = vmatprep.subr.bf16.mxu0 0
        %1571 = vmatpush1.bf16.xpose.msra.mxu0 %v1540
        %1572 = vmatprep.subr.bf16.mxu0 0
        %1573 = vmatpush2.bf16.xpose.msra.mxu0 %v1555
        %1574 = vmatprep.subr.bf16.mxu0 0
        %1575 = vmatpush2.bf16.xpose.msra.mxu0 %v1554
        %1576 = vmatprep.subr.bf16.mxu0 0
        %1577 = vmatpush2.bf16.xpose.msra.mxu0 %v1553
        %1578 = vmatprep.subr.bf16.mxu0 0
        %1579 = vmatpush2.bf16.xpose.msra.mxu0 %v1552
        %1580 = vmatprep.subr.bf16.mxu0 0
        %1581 = vmatpush2.bf16.xpose.msra.mxu0 %v1551
        %1582 = vmatprep.subr.bf16.mxu0 0
        %1583 = vmatpush2.bf16.xpose.msra.mxu0 %v1550
        %1584 = vmatprep.subr.bf16.mxu0 0
        %1585 = vmatpush2.bf16.xpose.msra.mxu0 %v1549
        %1586 = vmatprep.subr.bf16.mxu0 0
        %1587 = vmatpush2.bf16.xpose.msra.mxu0 %v1548
        %1588 = vmatprep.mubr.bf16.mxu0 0
        %1589 = vmatmul.mubr.bf16.gmra.mxu0 %v1532
        %v1590 = vpop.f32.mrf.mxu0
        %v1591 = vadd.f32 0.0, %v1590
        %v1592 = vpop.f32.mrf.mxu0
        %v1593 = vadd.f32 0.0, %v1592
        %v1594 = vpop.f32.mrf.mxu0
        %v1595 = vadd.f32 0.0, %v1594
        %v1596 = vpop.f32.mrf.mxu0
        %v1597 = vadd.f32 0.0, %v1596
        %1598 = vmatprep.mubr.bf16.mxu0 0
        %1599 = vmatmul.mubr.bf16.gmra.mxu0 %v1533
        %v1600 = vpop.f32.mrf.mxu0
        %v1601 = vadd.f32 0.0, %v1600
        %v1602 = vpop.f32.mrf.mxu0
        %v1603 = vadd.f32 0.0, %v1602
        %v1604 = vpop.f32.mrf.mxu0
        %v1605 = vadd.f32 0.0, %v1604
        %v1606 = vpop.f32.mrf.mxu0
        %v1607 = vadd.f32 0.0, %v1606
        %1608 = vmatprep.mubr.bf16.mxu0 0
        %1609 = vmatmul.mubr.bf16.gmra.mxu0 %v1534
        %v1610 = vpop.f32.mrf.mxu0
        %v1611 = vadd.f32 0.0, %v1610
        %v1612 = vpop.f32.mrf.mxu0
        %v1613 = vadd.f32 0.0, %v1612
        %v1614 = vpop.f32.mrf.mxu0
        %v1615 = vadd.f32 0.0, %v1614
        %v1616 = vpop.f32.mrf.mxu0
        %v1617 = vadd.f32 0.0, %v1616
        %1618 = vmatprep.mubr.bf16.mxu0 0
        %1619 = vmatmul.mubr.bf16.gmra.mxu0 %v1535
        %v1620 = vpop.f32.mrf.mxu0
        %v1621 = vadd.f32 0.0, %v1620
        %v1622 = vpop.f32.mrf.mxu0
        %v1623 = vadd.f32 0.0, %v1622
        %v1624 = vpop.f32.mrf.mxu0
        %v1625 = vadd.f32 0.0, %v1624
        %v1626 = vpop.f32.mrf.mxu0
        %v1627 = vadd.f32 0.0, %v1626
        %1628 = vmatprep.mubr.bf16.mxu0 0
        %1629 = vmatmul.mubr.bf16.gmra.mxu0 %v1536
        %v1630 = vpop.f32.mrf.mxu0
        %v1631 = vadd.f32 0.0, %v1630
        %v1632 = vpop.f32.mrf.mxu0
        %v1633 = vadd.f32 0.0, %v1632
        %v1634 = vpop.f32.mrf.mxu0
        %v1635 = vadd.f32 0.0, %v1634
        %v1636 = vpop.f32.mrf.mxu0
        %v1637 = vadd.f32 0.0, %v1636
        %1638 = vmatprep.mubr.bf16.mxu0 0
        %1639 = vmatmul.mubr.bf16.gmra.mxu0 %v1537
        %v1640 = vpop.f32.mrf.mxu0
        %v1641 = vadd.f32 0.0, %v1640
        %v1642 = vpop.f32.mrf.mxu0
        %v1643 = vadd.f32 0.0, %v1642
        %v1644 = vpop.f32.mrf.mxu0
        %v1645 = vadd.f32 0.0, %v1644
        %v1646 = vpop.f32.mrf.mxu0
        %v1647 = vadd.f32 0.0, %v1646
        %1648 = vmatprep.mubr.bf16.mxu0 0
        %1649 = vmatmul.mubr.bf16.gmra.mxu0 %v1538
        %v1650 = vpop.f32.mrf.mxu0
        %v1651 = vadd.f32 0.0, %v1650
        %v1652 = vpop.f32.mrf.mxu0
        %v1653 = vadd.f32 0.0, %v1652
        %v1654 = vpop.f32.mrf.mxu0
        %v1655 = vadd.f32 0.0, %v1654
        %v1656 = vpop.f32.mrf.mxu0
        %v1657 = vadd.f32 0.0, %v1656
        %1658 = vmatprep.mubr.bf16.mxu0 0
        %1659 = vmatmul.mubr.bf16.gmra.mxu0 %v1539
        %v1660 = vpop.f32.mrf.mxu0
        %v1661 = vadd.f32 0.0, %v1660
        %v1662 = vpop.f32.mrf.mxu0
        %v1663 = vadd.f32 0.0, %v1662
        %v1664 = vpop.f32.mrf.mxu0
        %v1665 = vadd.f32 0.0, %v1664
        %v1666 = vpop.f32.mrf.mxu0
        %v1667 = vadd.f32 0.0, %v1666
        %1668 = vdwg.mxu0
        %v1669 = vlaneseq
        %v1670 = vshrl.u32 %v1669, 7
        %v1671 = vadd.s32 %v1670, 8
        %v1672 = vadd.s32 %v1670, 16
        %v1673 = vadd.s32 %v1670, 24
        %v1674 = vadd.s32 %v1670, 32
        %v1675 = vadd.s32 %v1670, 40
        %v1676 = vadd.s32 %v1670, 48
        %v1677 = vadd.s32 %v1670, 56
        %v1678 = vadd.s32 %v1670, 64
        %v1679 = vadd.s32 %v1670, 72
        %v1680 = vadd.s32 %v1670, 80
        %v1681 = vadd.s32 %v1670, 88
        %v1682 = vadd.s32 %v1670, 96
        %v1683 = vadd.s32 %v1670, 104
        %v1684 = vadd.s32 %v1670, 112
        %v1685 = vadd.s32 %v1670, 120
        %v1686 = vstv %s234
        %v1687 = vadd.s32 %v1686, %v1670
        %v1688 = vadd.s32 %v1686, %v1671
        %v1689 = vadd.s32 %v1686, %v1672
        %v1690 = vadd.s32 %v1686, %v1673
        %v1691 = vadd.s32 %v1686, %v1674
        %v1692 = vadd.s32 %v1686, %v1675
        %v1693 = vadd.s32 %v1686, %v1676
        %v1694 = vadd.s32 %v1686, %v1677
        %v1695 = vadd.s32 %v1686, %v1678
        %v1696 = vadd.s32 %v1686, %v1679
        %v1697 = vadd.s32 %v1686, %v1680
        %v1698 = vadd.s32 %v1686, %v1681
        %v1699 = vadd.s32 %v1686, %v1682
        %v1700 = vadd.s32 %v1686, %v1683
        %v1701 = vadd.s32 %v1686, %v1684
        %v1702 = vadd.s32 %v1686, %v1685
        %v1703 = vlaneseq
        %v1704 = vand.u32 %v1703, 127
        %v1705 = vadd.s32 %v1704, 128
        %vm1706 = vcmp.le.s32.totalorder %v1704, %v1687
        %vm1707 = vcmp.le.s32.totalorder %v1705, %v1687
        %vm1708 = vcmp.le.s32.totalorder %v1704, %v1688
        %vm1709 = vcmp.le.s32.totalorder %v1705, %v1688
        %vm1710 = vcmp.le.s32.totalorder %v1704, %v1689
        %vm1711 = vcmp.le.s32.totalorder %v1705, %v1689
        %vm1712 = vcmp.le.s32.totalorder %v1704, %v1690
        %vm1713 = vcmp.le.s32.totalorder %v1705, %v1690
        %vm1714 = vcmp.le.s32.totalorder %v1704, %v1691
        %vm1715 = vcmp.le.s32.totalorder %v1705, %v1691
        %vm1716 = vcmp.le.s32.totalorder %v1704, %v1692
        %vm1717 = vcmp.le.s32.totalorder %v1705, %v1692
        %vm1718 = vcmp.le.s32.totalorder %v1704, %v1693
        %vm1719 = vcmp.le.s32.totalorder %v1705, %v1693
        %vm1720 = vcmp.le.s32.totalorder %v1704, %v1694
        %vm1721 = vcmp.le.s32.totalorder %v1705, %v1694
        %vm1722 = vcmp.le.s32.totalorder %v1704, %v1695
        %vm1723 = vcmp.le.s32.totalorder %v1705, %v1695
        %vm1724 = vcmp.le.s32.totalorder %v1704, %v1696
        %vm1725 = vcmp.le.s32.totalorder %v1705, %v1696
        %vm1726 = vcmp.le.s32.totalorder %v1704, %v1697
        %vm1727 = vcmp.le.s32.totalorder %v1705, %v1697
        %vm1728 = vcmp.le.s32.totalorder %v1704, %v1698
        %vm1729 = vcmp.le.s32.totalorder %v1705, %v1698
        %vm1730 = vcmp.le.s32.totalorder %v1704, %v1699
        %vm1731 = vcmp.le.s32.totalorder %v1705, %v1699
        %vm1732 = vcmp.le.s32.totalorder %v1704, %v1700
        %vm1733 = vcmp.le.s32.totalorder %v1705, %v1700
        %vm1734 = vcmp.le.s32.totalorder %v1704, %v1701
        %vm1735 = vcmp.le.s32.totalorder %v1705, %v1701
        %vm1736 = vcmp.le.s32.totalorder %v1704, %v1702
        %vm1737 = vcmp.le.s32.totalorder %v1705, %v1702
        %v1738 = vsel %vm1706, %v1591, -inf
        %v1739 = vsel %vm1707, %v1593, -inf
        %v1740 = vsel %vm1708, %v1595, -inf
        %v1741 = vsel %vm1709, %v1597, -inf
        %v1742 = vsel %vm1710, %v1601, -inf
        %v1743 = vsel %vm1711, %v1603, -inf
        %v1744 = vsel %vm1712, %v1605, -inf
        %v1745 = vsel %vm1713, %v1607, -inf
        %v1746 = vsel %vm1714, %v1611, -inf
        %v1747 = vsel %vm1715, %v1613, -inf
        %v1748 = vsel %vm1716, %v1615, -inf
        %v1749 = vsel %vm1717, %v1617, -inf
        %v1750 = vsel %vm1718, %v1621, -inf
        %v1751 = vsel %vm1719, %v1623, -inf
        %v1752 = vsel %vm1720, %v1625, -inf
        %v1753 = vsel %vm1721, %v1627, -inf
        %v1754 = vsel %vm1722, %v1631, -inf
        %v1755 = vsel %vm1723, %v1633, -inf
        %v1756 = vsel %vm1724, %v1635, -inf
        %v1757 = vsel %vm1725, %v1637, -inf
        %v1758 = vsel %vm1726, %v1641, -inf
        %v1759 = vsel %vm1727, %v1643, -inf
        %v1760 = vsel %vm1728, %v1645, -inf
        %v1761 = vsel %vm1729, %v1647, -inf
        %v1762 = vsel %vm1730, %v1651, -inf
        %v1763 = vsel %vm1731, %v1653, -inf
        %v1764 = vsel %vm1732, %v1655, -inf
        %v1765 = vsel %vm1733, %v1657, -inf
        %v1766 = vsel %vm1734, %v1661, -inf
        %v1767 = vsel %vm1735, %v1663, -inf
        %v1768 = vsel %vm1736, %v1665, -inf
        %v1769 = vsel %vm1737, %v1667, -inf
        %v1770 = vmax.f32 %v1738, %v1739
        %1771 = vmax.xlane.f32.xlu0 %v1770
        %v1772 = vpop.xlane.xlu0 %1771
        %v1773 = vmax.f32 %v1740, %v1741
        %1774 = vmax.xlane.f32.xlu0 %v1773
        %v1775 = vpop.xlane.xlu0 %1774
        %v1776 = vmax.f32 %v1742, %v1743
        %1777 = vmax.xlane.f32.xlu0 %v1776
        %v1778 = vpop.xlane.xlu0 %1777
        %v1779 = vmax.f32 %v1744, %v1745
        %1780 = vmax.xlane.f32.xlu0 %v1779
        %v1781 = vpop.xlane.xlu0 %1780
        %v1782 = vmax.f32 %v1746, %v1747
        %1783 = vmax.xlane.f32.xlu0 %v1782
        %v1784 = vpop.xlane.xlu0 %1783
        %v1785 = vmax.f32 %v1748, %v1749
        %1786 = vmax.xlane.f32.xlu0 %v1785
        %v1787 = vpop.xlane.xlu0 %1786
        %v1788 = vmax.f32 %v1750, %v1751
        %1789 = vmax.xlane.f32.xlu0 %v1788
        %v1790 = vpop.xlane.xlu0 %1789
        %v1791 = vmax.f32 %v1752, %v1753
        %1792 = vmax.xlane.f32.xlu0 %v1791
        %v1793 = vpop.xlane.xlu0 %1792
        %v1794 = vmax.f32 %v1754, %v1755
        %1795 = vmax.xlane.f32.xlu0 %v1794
        %v1796 = vpop.xlane.xlu0 %1795
        %v1797 = vmax.f32 %v1756, %v1757
        %1798 = vmax.xlane.f32.xlu0 %v1797
        %v1799 = vpop.xlane.xlu0 %1798
        %v1800 = vmax.f32 %v1758, %v1759
        %1801 = vmax.xlane.f32.xlu0 %v1800
        %v1802 = vpop.xlane.xlu0 %1801
        %v1803 = vmax.f32 %v1760, %v1761
        %1804 = vmax.xlane.f32.xlu0 %v1803
        %v1805 = vpop.xlane.xlu0 %1804
        %v1806 = vmax.f32 %v1762, %v1763
        %1807 = vmax.xlane.f32.xlu0 %v1806
        %v1808 = vpop.xlane.xlu0 %1807
        %v1809 = vmax.f32 %v1764, %v1765
        %1810 = vmax.xlane.f32.xlu0 %v1809
        %v1811 = vpop.xlane.xlu0 %1810
        %v1812 = vmax.f32 %v1766, %v1767
        %1813 = vmax.xlane.f32.xlu0 %v1812
        %v1814 = vpop.xlane.xlu0 %1813
        %v1815 = vmax.f32 %v1768, %v1769
        %1816 = vmax.xlane.f32.xlu0 %v1815
        %v1817 = vpop.xlane.xlu0 %1816
        %v1818 = vsub.f32 %v1738, %v1772
        %v1819 = vsub.f32 %v1739, %v1772
        %v1820 = vsub.f32 %v1740, %v1775
        %v1821 = vsub.f32 %v1741, %v1775
        %v1822 = vsub.f32 %v1742, %v1778
        %v1823 = vsub.f32 %v1743, %v1778
        %v1824 = vsub.f32 %v1744, %v1781
        %v1825 = vsub.f32 %v1745, %v1781
        %v1826 = vsub.f32 %v1746, %v1784
        %v1827 = vsub.f32 %v1747, %v1784
        %v1828 = vsub.f32 %v1748, %v1787
        %v1829 = vsub.f32 %v1749, %v1787
        %v1830 = vsub.f32 %v1750, %v1790
        %v1831 = vsub.f32 %v1751, %v1790
        %v1832 = vsub.f32 %v1752, %v1793
        %v1833 = vsub.f32 %v1753, %v1793
        %v1834 = vsub.f32 %v1754, %v1796
        %v1835 = vsub.f32 %v1755, %v1796
        %v1836 = vsub.f32 %v1756, %v1799
        %v1837 = vsub.f32 %v1757, %v1799
        %v1838 = vsub.f32 %v1758, %v1802
        %v1839 = vsub.f32 %v1759, %v1802
        %v1840 = vsub.f32 %v1760, %v1805
        %v1841 = vsub.f32 %v1761, %v1805
        %v1842 = vsub.f32 %v1762, %v1808
        %v1843 = vsub.f32 %v1763, %v1808
        %v1844 = vsub.f32 %v1764, %v1811
        %v1845 = vsub.f32 %v1765, %v1811
        %v1846 = vsub.f32 %v1766, %v1814
        %v1847 = vsub.f32 %v1767, %v1814
        %v1848 = vsub.f32 %v1768, %v1817
        %v1849 = vsub.f32 %v1769, %v1817
        %v1850 = vmul.f32 %v1818, 1.442695
        %v1851 = vpow.pop %v1850
        %v1852 = vmul.f32 %v1819, 1.442695
        %v1853 = vpow.pop %v1852
        %v1854 = vmul.f32 %v1820, 1.442695
        %v1855 = vpow.pop %v1854
        %v1856 = vmul.f32 %v1821, 1.442695
        %v1857 = vpow.pop %v1856
        %v1858 = vmul.f32 %v1822, 1.442695
        %v1859 = vpow.pop %v1858
        %v1860 = vmul.f32 %v1823, 1.442695
        %v1861 = vpow.pop %v1860
        %v1862 = vmul.f32 %v1824, 1.442695
        %v1863 = vpow.pop %v1862
        %v1864 = vmul.f32 %v1825, 1.442695
        %v1865 = vpow.pop %v1864
        %v1866 = vmul.f32 %v1826, 1.442695
        %v1867 = vpow.pop %v1866
        %v1868 = vmul.f32 %v1827, 1.442695
        %v1869 = vpow.pop %v1868
        %v1870 = vmul.f32 %v1828, 1.442695
        %v1871 = vpow.pop %v1870
        %v1872 = vmul.f32 %v1829, 1.442695
        %v1873 = vpow.pop %v1872
        %v1874 = vmul.f32 %v1830, 1.442695
        %v1875 = vpow.pop %v1874
        %v1876 = vmul.f32 %v1831, 1.442695
        %v1877 = vpow.pop %v1876
        %v1878 = vmul.f32 %v1832, 1.442695
        %v1879 = vpow.pop %v1878
        %v1880 = vmul.f32 %v1833, 1.442695
        %v1881 = vpow.pop %v1880
        %v1882 = vmul.f32 %v1834, 1.442695
        %v1883 = vpow.pop %v1882
        %v1884 = vmul.f32 %v1835, 1.442695
        %v1885 = vpow.pop %v1884
        %v1886 = vmul.f32 %v1836, 1.442695
        %v1887 = vpow.pop %v1886
        %v1888 = vmul.f32 %v1837, 1.442695
        %v1889 = vpow.pop %v1888
        %v1890 = vmul.f32 %v1838, 1.442695
        %v1891 = vpow.pop %v1890
        %v1892 = vmul.f32 %v1839, 1.442695
        %v1893 = vpow.pop %v1892
        %v1894 = vmul.f32 %v1840, 1.442695
        %v1895 = vpow.pop %v1894
        %v1896 = vmul.f32 %v1841, 1.442695
        %v1897 = vpow.pop %v1896
        %v1898 = vmul.f32 %v1842, 1.442695
        %v1899 = vpow.pop %v1898
        %v1900 = vmul.f32 %v1843, 1.442695
        %v1901 = vpow.pop %v1900
        %v1902 = vmul.f32 %v1844, 1.442695
        %v1903 = vpow.pop %v1902
        %v1904 = vmul.f32 %v1845, 1.442695
        %v1905 = vpow.pop %v1904
        %v1906 = vmul.f32 %v1846, 1.442695
        %v1907 = vpow.pop %v1906
        %v1908 = vmul.f32 %v1847, 1.442695
        %v1909 = vpow.pop %v1908
        %v1910 = vmul.f32 %v1848, 1.442695
        %v1911 = vpow.pop %v1910
        %v1912 = vmul.f32 %v1849, 1.442695
        %v1913 = vpow.pop %v1912
        %v1914 = vadd.f32 %v1851, %v1853
        %1915 = vadd.xlane.f32.xlu0 %v1914
        %v1916 = vpop.xlane.xlu0 %1915
        %v1917 = vadd.f32 %v1855, %v1857
        %1918 = vadd.xlane.f32.xlu0 %v1917
        %v1919 = vpop.xlane.xlu0 %1918
        %v1920 = vadd.f32 %v1859, %v1861
        %1921 = vadd.xlane.f32.xlu0 %v1920
        %v1922 = vpop.xlane.xlu0 %1921
        %v1923 = vadd.f32 %v1863, %v1865
        %1924 = vadd.xlane.f32.xlu0 %v1923
        %v1925 = vpop.xlane.xlu0 %1924
        %v1926 = vadd.f32 %v1867, %v1869
        %1927 = vadd.xlane.f32.xlu0 %v1926
        %v1928 = vpop.xlane.xlu0 %1927
        %v1929 = vadd.f32 %v1871, %v1873
        %1930 = vadd.xlane.f32.xlu0 %v1929
        %v1931 = vpop.xlane.xlu0 %1930
        %v1932 = vadd.f32 %v1875, %v1877
        %1933 = vadd.xlane.f32.xlu0 %v1932
        %v1934 = vpop.xlane.xlu0 %1933
        %v1935 = vadd.f32 %v1879, %v1881
        %1936 = vadd.xlane.f32.xlu0 %v1935
        %v1937 = vpop.xlane.xlu0 %1936
        %v1938 = vadd.f32 %v1883, %v1885
        %1939 = vadd.xlane.f32.xlu0 %v1938
        %v1940 = vpop.xlane.xlu0 %1939
        %v1941 = vadd.f32 %v1887, %v1889
        %1942 = vadd.xlane.f32.xlu0 %v1941
        %v1943 = vpop.xlane.xlu0 %1942
        %v1944 = vadd.f32 %v1891, %v1893
        %1945 = vadd.xlane.f32.xlu0 %v1944
        %v1946 = vpop.xlane.xlu0 %1945
        %v1947 = vadd.f32 %v1895, %v1897
        %1948 = vadd.xlane.f32.xlu0 %v1947
        %v1949 = vpop.xlane.xlu0 %1948
        %v1950 = vadd.f32 %v1899, %v1901
        %1951 = vadd.xlane.f32.xlu0 %v1950
        %v1952 = vpop.xlane.xlu0 %1951
        %v1953 = vadd.f32 %v1903, %v1905
        %1954 = vadd.xlane.f32.xlu0 %v1953
        %v1955 = vpop.xlane.xlu0 %1954
        %v1956 = vadd.f32 %v1907, %v1909
        %1957 = vadd.xlane.f32.xlu0 %v1956
        %v1958 = vpop.xlane.xlu0 %1957
        %v1959 = vadd.f32 %v1911, %v1913
        %1960 = vadd.xlane.f32.xlu0 %v1959
        %v1961 = vpop.xlane.xlu0 %1960
        %v1962 = vrcp.pop %v1916
        %v1963 = vrcp.pop %v1919
        %v1964 = vrcp.pop %v1922
        %v1965 = vrcp.pop %v1925
        %v1966 = vrcp.pop %v1928
        %v1967 = vrcp.pop %v1931
        %v1968 = vrcp.pop %v1934
        %v1969 = vrcp.pop %v1937
        %v1970 = vrcp.pop %v1940
        %v1971 = vrcp.pop %v1943
        %v1972 = vrcp.pop %v1946
        %v1973 = vrcp.pop %v1949
        %v1974 = vrcp.pop %v1952
        %v1975 = vrcp.pop %v1955
        %v1976 = vrcp.pop %v1958
        %v1977 = vrcp.pop %v1961
        %v1978 = vmul.f32 %v1851, %v1962
        %v1979 = vmul.f32 %v1853, %v1962
        %v1980 = vmul.f32 %v1855, %v1963
        %v1981 = vmul.f32 %v1857, %v1963
        %v1982 = vmul.f32 %v1859, %v1964
        %v1983 = vmul.f32 %v1861, %v1964
        %v1984 = vmul.f32 %v1863, %v1965
        %v1985 = vmul.f32 %v1865, %v1965
        %v1986 = vmul.f32 %v1867, %v1966
        %v1987 = vmul.f32 %v1869, %v1966
        %v1988 = vmul.f32 %v1871, %v1967
        %v1989 = vmul.f32 %v1873, %v1967
        %v1990 = vmul.f32 %v1875, %v1968
        %v1991 = vmul.f32 %v1877, %v1968
        %v1992 = vmul.f32 %v1879, %v1969
        %v1993 = vmul.f32 %v1881, %v1969
        %v1994 = vmul.f32 %v1883, %v1970
        %v1995 = vmul.f32 %v1885, %v1970
        %v1996 = vmul.f32 %v1887, %v1971
        %v1997 = vmul.f32 %v1889, %v1971
        %v1998 = vmul.f32 %v1891, %v1972
        %v1999 = vmul.f32 %v1893, %v1972
        %v2000 = vmul.f32 %v1895, %v1973
        %v2001 = vmul.f32 %v1897, %v1973
        %v2002 = vmul.f32 %v1899, %v1974
        %v2003 = vmul.f32 %v1901, %v1974
        %v2004 = vmul.f32 %v1903, %v1975
        %v2005 = vmul.f32 %v1905, %v1975
        %v2006 = vmul.f32 %v1907, %v1976
        %v2007 = vmul.f32 %v1909, %v1976
        %v2008 = vmul.f32 %v1911, %v1977
        %v2009 = vmul.f32 %v1913, %v1977
        %v2010 = vpack.c.bf16 %v1980, %v1978
        %v2011 = vpack.c.bf16 %v1981, %v1979
        %v2012 = vpack.c.bf16 %v1984, %v1982
        %v2013 = vpack.c.bf16 %v1985, %v1983
        %v2014 = vpack.c.bf16 %v1988, %v1986
        %v2015 = vpack.c.bf16 %v1989, %v1987
        %v2016 = vpack.c.bf16 %v1992, %v1990
        %v2017 = vpack.c.bf16 %v1993, %v1991
        %v2018 = vpack.c.bf16 %v1996, %v1994
        %v2019 = vpack.c.bf16 %v1997, %v1995
        %v2020 = vpack.c.bf16 %v2000, %v1998
        %v2021 = vpack.c.bf16 %v2001, %v1999
        %v2022 = vpack.c.bf16 %v2004, %v2002
        %v2023 = vpack.c.bf16 %v2005, %v2003
        %v2024 = vpack.c.bf16 %v2008, %v2006
        %v2025 = vpack.c.bf16 %v2009, %v2007
        %v2026 = vpack.c.bf16 %v1380, %v1376
        %v2027 = vpack.c.bf16 %v1390, %v1386
        %v2028 = vpack.c.bf16 %v1400, %v1396
        %v2029 = vpack.c.bf16 %v1410, %v1406
        %v2030 = vpack.c.bf16 %v1420, %v1416
        %v2031 = vpack.c.bf16 %v1430, %v1426
        %v2032 = vpack.c.bf16 %v1440, %v1436
        %v2033 = vpack.c.bf16 %v1450, %v1446
        %v2034 = vpack.c.bf16 %v1460, %v1456
        %v2035 = vpack.c.bf16 %v1470, %v1466
        %v2036 = vpack.c.bf16 %v1480, %v1476
        %v2037 = vpack.c.bf16 %v1490, %v1486
        %v2038 = vpack.c.bf16 %v1500, %v1496
        %v2039 = vpack.c.bf16 %v1510, %v1506
        %v2040 = vpack.c.bf16 %v1520, %v1516
        %v2041 = vpack.c.bf16 %v1530, %v1526
        %2042 = vmatprep.subr.bf16.mxu0 0
        %2043 = vmatpush1.bf16.msra.mxu0 %v2033
        %2044 = vmatprep.subr.bf16.mxu0 0
        %2045 = vmatpush1.bf16.msra.mxu0 %v2032
        %2046 = vmatprep.subr.bf16.mxu0 0
        %2047 = vmatpush1.bf16.msra.mxu0 %v2031
        %2048 = vmatprep.subr.bf16.mxu0 0
        %2049 = vmatpush1.bf16.msra.mxu0 %v2030
        %2050 = vmatprep.subr.bf16.mxu0 0
        %2051 = vmatpush1.bf16.msra.mxu0 %v2029
        %2052 = vmatprep.subr.bf16.mxu0 0
        %2053 = vmatpush1.bf16.msra.mxu0 %v2028
        %2054 = vmatprep.subr.bf16.mxu0 0
        %2055 = vmatpush1.bf16.msra.mxu0 %v2027
        %2056 = vmatprep.subr.bf16.mxu0 0
        %2057 = vmatpush1.bf16.msra.mxu0 %v2026
        %2058 = vmatprep.subr.bf16.mxu0 0
        %2059 = vmatpush2.bf16.msra.mxu0 %v2041
        %2060 = vmatprep.subr.bf16.mxu0 0
        %2061 = vmatpush2.bf16.msra.mxu0 %v2040
        %2062 = vmatprep.subr.bf16.mxu0 0
        %2063 = vmatpush2.bf16.msra.mxu0 %v2039
        %2064 = vmatprep.subr.bf16.mxu0 0
        %2065 = vmatpush2.bf16.msra.mxu0 %v2038
        %2066 = vmatprep.subr.bf16.mxu0 0
        %2067 = vmatpush2.bf16.msra.mxu0 %v2037
        %2068 = vmatprep.subr.bf16.mxu0 0
        %2069 = vmatpush2.bf16.msra.mxu0 %v2036
        %2070 = vmatprep.subr.bf16.mxu0 0
        %2071 = vmatpush2.bf16.msra.mxu0 %v2035
        %2072 = vmatprep.subr.bf16.mxu0 0
        %2073 = vmatpush2.bf16.msra.mxu0 %v2034
        %2074 = vmatprep.mubr.bf16.mxu0 %v2011
        %2075 = vmatmul.mubr.bf16.gmra.mxu0 %v2010
        %v2076 = vpop.f32.mrf.mxu0
        %v2077 = vadd.f32 0.0, %v2076
        %v2078 = vpop.f32.mrf.mxu0
        %v2079 = vpop.f32.mrf.mxu0
        %v2080 = vadd.f32 0.0, %v2079
        %v2081 = vpop.f32.mrf.mxu0
        %2082 = vmatprep.mubr.bf16.mxu0 %v2013
        %2083 = vmatmul.mubr.bf16.gmra.mxu0 %v2012
        %v2084 = vpop.f32.mrf.mxu0
        %v2085 = vadd.f32 0.0, %v2084
        %v2086 = vpop.f32.mrf.mxu0
        %v2087 = vpop.f32.mrf.mxu0
        %v2088 = vadd.f32 0.0, %v2087
        %v2089 = vpop.f32.mrf.mxu0
        %2090 = vmatprep.mubr.bf16.mxu0 %v2015
        %2091 = vmatmul.mubr.bf16.gmra.mxu0 %v2014
        %v2092 = vpop.f32.mrf.mxu0
        %v2093 = vadd.f32 0.0, %v2092
        %v2094 = vpop.f32.mrf.mxu0
        %v2095 = vpop.f32.mrf.mxu0
        %v2096 = vadd.f32 0.0, %v2095
        %v2097 = vpop.f32.mrf.mxu0
        %2098 = vmatprep.mubr.bf16.mxu0 %v2017
        %2099 = vmatmul.mubr.bf16.gmra.mxu0 %v2016
        %v2100 = vpop.f32.mrf.mxu0
        %v2101 = vadd.f32 0.0, %v2100
        %v2102 = vpop.f32.mrf.mxu0
        %v2103 = vpop.f32.mrf.mxu0
        %v2104 = vadd.f32 0.0, %v2103
        %v2105 = vpop.f32.mrf.mxu0
        %2106 = vmatprep.mubr.bf16.mxu0 %v2019
        %2107 = vmatmul.mubr.bf16.gmra.mxu0 %v2018
        %v2108 = vpop.f32.mrf.mxu0
        %v2109 = vadd.f32 0.0, %v2108
        %v2110 = vpop.f32.mrf.mxu0
        %v2111 = vpop.f32.mrf.mxu0
        %v2112 = vadd.f32 0.0, %v2111
        %v2113 = vpop.f32.mrf.mxu0
        %2114 = vmatprep.mubr.bf16.mxu0 %v2021
        %2115 = vmatmul.mubr.bf16.gmra.mxu0 %v2020
        %v2116 = vpop.f32.mrf.mxu0
        %v2117 = vadd.f32 0.0, %v2116
        %v2118 = vpop.f32.mrf.mxu0
        %v2119 = vpop.f32.mrf.mxu0
        %v2120 = vadd.f32 0.0, %v2119
        %v2121 = vpop.f32.mrf.mxu0
        %2122 = vmatprep.mubr.bf16.mxu0 %v2023
        %2123 = vmatmul.mubr.bf16.gmra.mxu0 %v2022
        %v2124 = vpop.f32.mrf.mxu0
        %v2125 = vadd.f32 0.0, %v2124
        %v2126 = vpop.f32.mrf.mxu0
        %v2127 = vpop.f32.mrf.mxu0
        %v2128 = vadd.f32 0.0, %v2127
        %v2129 = vpop.f32.mrf.mxu0
        %2130 = vmatprep.mubr.bf16.mxu0 %v2025
        %2131 = vmatmul.mubr.bf16.gmra.mxu0 %v2024
        %v2132 = vpop.f32.mrf.mxu0
        %v2133 = vadd.f32 0.0, %v2132
        %v2134 = vpop.f32.mrf.mxu0
        %v2135 = vpop.f32.mrf.mxu0
        %v2136 = vadd.f32 0.0, %v2135
        %v2137 = vpop.f32.mrf.mxu0
        %2138 = vdwg.mxu0
        %2139 = vst [vmem:[%s231] sm:$0xff] %v2077
        %2140 = vst [vmem:[%s231 + $0x8] sm:$0xff] %v2080
        %2141 = vst [vmem:[%s231 + $0x10] sm:$0xff] %v2085
        %2142 = vst [vmem:[%s231 + $0x18] sm:$0xff] %v2088
        %2143 = vst [vmem:[%s231 + $0x20] sm:$0xff] %v2093
        %2144 = vst [vmem:[%s231 + $0x28] sm:$0xff] %v2096
        %2145 = vst [vmem:[%s231 + $0x30] sm:$0xff] %v2101
        %2146 = vst [vmem:[%s231 + $0x38] sm:$0xff] %v2104
        %2147 = vst [vmem:[%s231 + $0x40] sm:$0xff] %v2109
        %2148 = vst [vmem:[%s231 + $0x48] sm:$0xff] %v2112
        %2149 = vst [vmem:[%s231 + $0x50] sm:$0xff] %v2117
        %2150 = vst [vmem:[%s231 + $0x58] sm:$0xff] %v2120
        %2151 = vst [vmem:[%s231 + $0x60] sm:$0xff] %v2125
        %2152 = vst [vmem:[%s231 + $0x68] sm:$0xff] %v2128
        %2153 = vst [vmem:[%s231 + $0x70] sm:$0xff] %v2133
        %2154 = vst [vmem:[%s231 + $0x78] sm:$0xff] %v2136
        %s2155 = sand.u32 %s111, 1
        %s2156 = scalar_lea.sflag [#allocation4], %s2155
        %s2157 = sand.u32 %s111, 1
        %s2158 = smul.addr %s2157, 128
        %s2159 = scalar_lea.vmem [#allocation8], %s2158
        // Predicated region
        $region45: #{tpu_custom_call.1} parent=31 // pred_check
          %p2160 = pneg %p121
        $region46: #{tpu_custom_call.1} parent=31 // pred_check_branch
          %2162 = sbr.rel (%p2160) target = $region48
        $region47: #{tpu_custom_call.1} parent=31 // pred_region
          %s2163 = smul.u32 16, %s26
          %s2165 = ssub.s32 2048, 2048
          %2166 = vsyncadd %s2156, %s2165
          %s2167 = smul.addr %s25, 32
          %s2168 = sadd.s32 %s2163, %s2167
          %s2169 = smul.addr %s2168, 128
          %s2170 = scalar_lea.hbm %s3, %s2169
          %s2171 = sshll.u32 %s2159, 4
          %s2172 = int_to_ptr.vmem [resolvable:$true] %s2171
          %2177 = dma.vmem_to_hbm [thread:$0]  %s2172, 2048, %s2170, %s2156, 128, 128, 8
        $region48: #{tpu_custom_call.1} parent=31 // pred_fallthru
          _
      $region32: #{tpu_custom_call.1} parent=5 // pred_fallthru
        _
      %p2178 = scmp.le.s32.totalorder 2, %s16
      // Predicated region
      $region49: #{tpu_custom_call.1} parent=5 // pred_check
        %p2179 = pneg %p2178
      $region50: #{tpu_custom_call.1} parent=5 // pred_check_branch
        %2181 = sbr.rel (%p2179) target = $region52
      $region51: #{tpu_custom_call.1} parent=5 // pred_region
        %s2182 = ssub.s32 %s16, 2
        // Predicated region
        $region53: #{tpu_custom_call.1} parent=51 // pred_check
          %p2183 = pneg %p127
        $region54: #{tpu_custom_call.1} parent=51 // pred_check_branch
          %2185 = sbr.rel (%p2183) target = $region56
        $region55: #{tpu_custom_call.1} parent=51 // pred_region
          %s2186 = sand.u32 %s112, 1
          %s2187 = scalar_lea.sflag [#allocation4], %s2186
          %s2188 = sand.u32 %s112, 1
          %s2189 = smul.addr %s2188, 128
          %s2190 = scalar_lea.vmem [#allocation8], %s2189
          %2191 = dma.done %s2187, 2048
        $region56: #{tpu_custom_call.1} parent=51 // pred_fallthru
          _
      $region52: #{tpu_custom_call.1} parent=5 // pred_fallthru
        _
    $region6: #{tpu_custom_call.1} parent=1 // loop_footer
      %s20 = sadd.s32 1, %s16
    $region7: #{tpu_custom_call.1} parent=1 // loop_footer_branch
      %15 = sbr.rel target = $region3
    $region8: #{tpu_custom_call.1} parent=1 // loop_exit
      _
    %2192 = vsyncpa [#allocation3], 1
    %s2193 = scalar_lea.sflag [#allocation3], 1
    %2194 = vsyncpa %s2193, 1
    %2195 = vsyncpa [#allocation6], 1
    %2196 = vsyncpa [#allocation4], 1
    %s2197 = scalar_lea.sflag [#allocation4], 1
    %2198 = vsyncpa %s2197, 1

</llo_original>
